<compile_context>
chip_gen: v6e
topology: v6e:2x2x1
jax: 0.10.0
libtpu: 0.0.40
codegen_flags: <defaults>
</compile_context>

<pallas_src>
import jax
import jax.numpy as jnp
from jax import lax
from jax.experimental import pallas as pl
from jax.experimental.pallas import tpu as pltpu


def lstm_tagger_kernel(emb_ref, wih_ref, whh_ref, bg_ref, wtag_ref, btag_ref,
                       out_ref, pre_ref, hs_ref):
    seq_len = emb_ref.shape[0]
    hp = whh_ref.shape[0]          # padded hidden size (multiple of 128)

    # ---- Hoisted input projection for ALL timesteps (off the serial chain):
    #      one (S, E) @ (E, 4Hp) matmul + bias broadcast, into VMEM scratch.
    pre_ref[...] = (
        jnp.dot(emb_ref[...], wih_ref[...], preferred_element_type=jnp.float32)
        + bg_ref[...])

    def step(t, carry):
        h, c = carry                                            # (1, Hp) f32 each
        gates = pre_ref[pl.ds(t, 1), :] + jnp.dot(
            h, whh_ref[...], preferred_element_type=jnp.float32)  # (1, 4Hp)
        # Single EUP push: tanh over the whole gate vector. i/f/o columns were
        # pre-scaled by 0.5 in the wrapper, so sigmoid(z) = 0.5*tanh(z/2) + 0.5.
        y = jnp.tanh(gates)
        i_g = 0.5 * y[:, 0 * hp:1 * hp] + 0.5                   # vreg-aligned slices
        f_g = 0.5 * y[:, 1 * hp:2 * hp] + 0.5
        g_g = y[:, 2 * hp:3 * hp]
        o_g = 0.5 * y[:, 3 * hp:4 * hp] + 0.5
        c_new = f_g * c + i_g * g_g
        h_new = o_g * jnp.tanh(c_new)
        hs_ref[pl.ds(t, 1), :] = h_new                          # lane-dense (128) store
        return (h_new, c_new)

    h0 = jnp.zeros((1, hp), jnp.float32)
    c0 = jnp.zeros((1, hp), jnp.float32)
    lax.fori_loop(0, seq_len, step, (h0, c0), unroll=True)

    # ---- Hoisted tag projection + log_softmax over the whole sequence, one store.
    tag = (jnp.dot(hs_ref[...], wtag_ref[...], preferred_element_type=jnp.float32)
           + btag_ref[...])
    m = jnp.max(tag, axis=-1, keepdims=True)
    lse = jnp.log(jnp.sum(jnp.exp(tag - m), axis=-1, keepdims=True)) + m
    out_ref[...] = (tag - lse).astype(out_ref.dtype)


def _round_up(x, m):
    return ((x + m - 1) // m) * m


def lstm_tagger_forward(sentence, params):
    """sentence: (seq_len,) int32 token ids. Returns (seq_len, tagset_size) log-probs."""
    emb_table, w_ih, w_hh, b_ih, b_hh, w_tag, b_tag = params
    seq_len = int(sentence.shape[0])
    four_h, _ = w_ih.shape
    hidden = four_h // 4
    tagset = w_tag.shape[0]
    hp = _round_up(hidden, 128)

    # Glue: embedding gather in plain JAX.
    # TODO(synk): fuse the gather via PrefetchScalarGridSpec + pl.Element row BlockSpec.
    embeds = jnp.take(emb_table, sentence, axis=0).astype(jnp.float32)      # (S, E)

    # ---- Pad hidden -> Hp so every gate block is 128-lane (vreg) aligned.
    #      Padded gate lanes get zero weights/bias -> padded h, c stay exactly 0.
    def pad_gate_rows(w):                       # (4H, X) -> (4Hp, X)
        x = w.reshape(4, hidden, -1)
        x = jnp.pad(x, ((0, 0), (0, hp - hidden), (0, 0)))
        return x.reshape(4 * hp, -1)

    w_ih_p = pad_gate_rows(w_ih.astype(jnp.float32))                        # (4Hp, E)
    w_hh_p = pad_gate_rows(w_hh.astype(jnp.float32))                        # (4Hp, H)
    w_hh_p = jnp.pad(w_hh_p, ((0, 0), (0, hp - hidden)))                    # (4Hp, Hp)
    b_g = (b_ih + b_hh).astype(jnp.float32).reshape(4, hidden)
    b_g = jnp.pad(b_g, ((0, 0), (0, hp - hidden))).reshape(1, 4 * hp)       # (1, 4Hp)
    w_tag_p = jnp.pad(w_tag.astype(jnp.float32), ((0, 0), (0, hp - hidden)))  # (T, Hp)

    # Pre-scale i/f/o gate columns by 0.5 so the kernel can use a single tanh:
    # sigmoid(z) == 0.5 * tanh(0.5 * z) + 0.5.
    gate_scale = jnp.concatenate([
        jnp.full((hp,), 0.5, jnp.float32),      # i
        jnp.full((hp,), 0.5, jnp.float32),      # f
        jnp.ones((hp,), jnp.float32),           # g (stays tanh)
        jnp.full((hp,), 0.5, jnp.float32)])     # o
    w_ih_t = w_ih_p.T * gate_scale[None, :]                                 # (E, 4Hp)
    w_hh_t = w_hh_p.T * gate_scale[None, :]                                 # (Hp, 4Hp)
    b_gates = b_g * gate_scale[None, :]                                     # (1, 4Hp)
    w_tag_t = w_tag_p.T                                                     # (Hp, T)
    b_tag2d = b_tag.reshape(1, -1).astype(jnp.float32)                      # (1, T)

    vmem = pltpu.MemorySpace.VMEM
    return pl.pallas_call(
        lstm_tagger_kernel,
        out_shape=jax.ShapeDtypeStruct((seq_len, tagset), jnp.float32),
        in_specs=[pl.BlockSpec(memory_space=vmem)] * 6,
        out_specs=pl.BlockSpec(memory_space=vmem),
        scratch_shapes=[
            pltpu.VMEM((seq_len, 4 * hp), jnp.float32),   # hoisted x @ W_ih_T + b
            pltpu.VMEM((seq_len, hp), jnp.float32),       # per-step hidden states
        ],
    )(embeds, w_ih_t, w_hh_t, b_gates, w_tag_t, b_tag2d)


def init_params(key, embedding_dim, hidden_dim, vocab_size, tagset_size):
    ks = jax.random.split(key, 7)
    k = 1.0 / jnp.sqrt(hidden_dim)
    emb_table = jax.random.normal(ks[0], (vocab_size, embedding_dim), jnp.float32)
    w_ih = jax.random.uniform(ks[1], (4 * hidden_dim, embedding_dim), jnp.float32, -k, k)
    w_hh = jax.random.uniform(ks[2], (4 * hidden_dim, hidden_dim), jnp.float32, -k, k)
    b_ih = jax.random.uniform(ks[3], (4 * hidden_dim,), jnp.float32, -k, k)
    b_hh = jax.random.uniform(ks[4], (4 * hidden_dim,), jnp.float32, -k, k)
    kt = 1.0 / jnp.sqrt(hidden_dim)
    w_tag = jax.random.uniform(ks[5], (tagset_size, hidden_dim), jnp.float32, -kt, kt)
    b_tag = jax.random.uniform(ks[6], (tagset_size,), jnp.float32, -kt, kt)
    return (emb_table, w_ih, w_hh, b_ih, b_hh, w_tag, b_tag)


def reference_forward(sentence, params):
    """Pure-JAX reference matching PyTorch semantics (for sanity check)."""
    emb_table, w_ih, w_hh, b_ih, b_hh, w_tag, b_tag = params
    H = w_hh.shape[1]
    embeds = jnp.take(emb_table, sentence, axis=0)

    def step(carry, x):
        h, c = carry
        gates = x @ w_ih.T + b_ih + h @ w_hh.T + b_hh
        i = jax.nn.sigmoid(gates[0:H])
        f = jax.nn.sigmoid(gates[H:2 * H])
        g = jnp.tanh(gates[2 * H:3 * H])
        o = jax.nn.sigmoid(gates[3 * H:4 * H])
        c_new = f * c + i * g
        h_new = o * jnp.tanh(c_new)
        return (h_new, c_new), h_new

    (_, _), hs = lax.scan(step, (jnp.zeros(H), jnp.zeros(H)), embeds)
    tag_space = hs @ w_tag.T + b_tag
    return jax.nn.log_softmax(tag_space, axis=1)


if __name__ == "__main__":
    EMBEDDING_DIM = 32
    HIDDEN_DIM = 32
    VOCAB_SIZE = 16
    TAGSET_SIZE = 8
    SEQ_LEN = 8

    key = jax.random.PRNGKey(0)
    pkey, skey = jax.random.split(key)
    params = init_params(pkey, EMBEDDING_DIM, HIDDEN_DIM, VOCAB_SIZE, TAGSET_SIZE)
    sentence = jax.random.randint(skey, (SEQ_LEN,), 0, VOCAB_SIZE, dtype=jnp.int32)

    out = jax.block_until_ready(lstm_tagger_forward(sentence, params))
    ref = jax.block_until_ready(reference_forward(sentence, params))

    assert out.shape == (SEQ_LEN, TAGSET_SIZE)
    assert jnp.allclose(out, ref, atol=1e-4, rtol=1e-4), "mismatch vs reference"

    print("KERNEL_OK")
</pallas_src>

<mosaic_0001>
module attributes {stable_mosaic.version = 11 : i64} {
  func.func @lstm_tagger_kernel(%arg0: memref<8x32xf32, #tpu.memory_space<vmem>>, %arg1: memref<32x512xf32, #tpu.memory_space<vmem>>, %arg2: memref<128x512xf32, #tpu.memory_space<vmem>>, %arg3: memref<1x512xf32, #tpu.memory_space<vmem>>, %arg4: memref<128x8xf32, #tpu.memory_space<vmem>>, %arg5: memref<1x8xf32, #tpu.memory_space<vmem>>, %arg6: memref<8x8xf32, #tpu.memory_space<vmem>>, %arg7: memref<8x512xf32, #tpu.memory_space<vmem>>, %arg8: memref<8x128xf32, #tpu.memory_space<vmem>>) attributes {dimension_semantics = [], scalar_prefetch = 0 : i64, scratch_operands = 2 : i64, tpu.core_type = #tpu.core_type<tc>} {
    %c0 = arith.constant 0 : index
    %c0_0 = arith.constant 0 : index
    %0 = vector.load %arg0[%c0, %c0_0] : memref<8x32xf32, #tpu.memory_space<vmem>>, vector<8x32xf32>
    %c0_1 = arith.constant 0 : index
    %c0_2 = arith.constant 0 : index
    %1 = vector.load %arg1[%c0_1, %c0_2] : memref<32x512xf32, #tpu.memory_space<vmem>>, vector<32x512xf32>
    %cst = arith.constant dense<0.000000e+00> : vector<8x512xf32>
    %2 = tpu.matmul %0, %1, %cst {dimension_numbers = #tpu.dot_dimension_numbers<[1], [0], [0], [1], [0, 0, 1, 1], [], []>} : vector<8x32xf32>, vector<32x512xf32>, vector<8x512xf32> -> vector<8x512xf32>
    %c0_3 = arith.constant 0 : index
    %c0_4 = arith.constant 0 : index
    %3 = vector.load %arg3[%c0_3, %c0_4] : memref<1x512xf32, #tpu.memory_space<vmem>>, vector<1x512xf32>
    %4 = vector.broadcast %3 : vector<1x512xf32> to vector<8x512xf32>
    %5 = arith.addf %2, %4 : vector<8x512xf32>
    %c0_5 = arith.constant 0 : index
    %c0_6 = arith.constant 0 : index
    %6 = vector.load %arg7[%c0_5, %c0_6] : memref<8x512xf32, #tpu.memory_space<vmem>>, vector<8x512xf32>
    tpu.vector_store %arg7[%c0_5, %c0_6], %5 {strides = array<i32>} : memref<8x512xf32, #tpu.memory_space<vmem>>, vector<8x512xf32>,
    %cst_7 = arith.constant 0.000000e+00 : f32
    %7 = vector.broadcast %cst_7 : f32 to vector<1x128xf32>
    %cst_8 = arith.constant 0.000000e+00 : f32
    %8 = vector.broadcast %cst_8 : f32 to vector<1x128xf32>
    %c0_i32 = arith.constant 0 : i32
    %9 = arith.index_cast %c0_i32 : i32 to index
    %c0_9 = arith.constant 0 : index
    %10 = vector.load %arg7[%9, %c0_9] : memref<8x512xf32, #tpu.memory_space<vmem>>, vector<1x512xf32>
    %c0_10 = arith.constant 0 : index
    %c0_11 = arith.constant 0 : index
    %11 = vector.load %arg2[%c0_10, %c0_11] : memref<128x512xf32, #tpu.memory_space<vmem>>, vector<128x512xf32>
    %cst_12 = arith.constant dense<0.000000e+00> : vector<1x512xf32>
    %12 = tpu.matmul %7, %11, %cst_12 {dimension_numbers = #tpu.dot_dimension_numbers<[1], [0], [0], [1], [0, 0, 1, 1], [], []>} : vector<1x128xf32>, vector<128x512xf32>, vector<1x512xf32> -> vector<1x512xf32>
    %13 = arith.addf %10, %12 : vector<1x512xf32>
    %14 = math.tanh %13 : vector<1x512xf32>
    %15 = vector.extract_strided_slice %14 {offsets = [0, 0], sizes = [1, 128], strides = [1, 1]} : vector<1x512xf32> to vector<1x128xf32>
    %cst_13 = arith.constant 5.000000e-01 : f32
    %16 = vector.broadcast %cst_13 : f32 to vector<1x128xf32>
    %17 = arith.mulf %16, %15 : vector<1x128xf32>
    %cst_14 = arith.constant 5.000000e-01 : f32
    %18 = vector.broadcast %cst_14 : f32 to vector<1x128xf32>
    %19 = arith.addf %17, %18 : vector<1x128xf32>
    %20 = vector.extract_strided_slice %14 {offsets = [0, 128], sizes = [1, 128], strides = [1, 1]} : vector<1x512xf32> to vector<1x128xf32>
    %cst_15 = arith.constant 5.000000e-01 : f32
    %21 = vector.broadcast %cst_15 : f32 to vector<1x128xf32>
    %22 = arith.mulf %21, %20 : vector<1x128xf32>
    %cst_16 = arith.constant 5.000000e-01 : f32
    %23 = vector.broadcast %cst_16 : f32 to vector<1x128xf32>
    %24 = arith.addf %22, %23 : vector<1x128xf32>
    %25 = vector.extract_strided_slice %14 {offsets = [0, 256], sizes = [1, 128], strides = [1, 1]} : vector<1x512xf32> to vector<1x128xf32>
    %26 = vector.extract_strided_slice %14 {offsets = [0, 384], sizes = [1, 128], strides = [1, 1]} : vector<1x512xf32> to vector<1x128xf32>
    %cst_17 = arith.constant 5.000000e-01 : f32
    %27 = vector.broadcast %cst_17 : f32 to vector<1x128xf32>
    %28 = arith.mulf %27, %26 : vector<1x128xf32>
    %cst_18 = arith.constant 5.000000e-01 : f32
    %29 = vector.broadcast %cst_18 : f32 to vector<1x128xf32>
    %30 = arith.addf %28, %29 : vector<1x128xf32>
    %31 = arith.mulf %24, %8 : vector<1x128xf32>
    %32 = arith.mulf %19, %25 : vector<1x128xf32>
    %33 = arith.addf %31, %32 : vector<1x128xf32>
    %34 = math.tanh %33 : vector<1x128xf32>
    %35 = arith.mulf %30, %34 : vector<1x128xf32>
    %36 = arith.index_cast %c0_i32 : i32 to index
    %c0_19 = arith.constant 0 : index
    %37 = vector.load %arg8[%36, %c0_19] : memref<8x128xf32, #tpu.memory_space<vmem>>, vector<1x128xf32>
    tpu.vector_store %arg8[%36, %c0_19], %35 {strides = array<i32>} : memref<8x128xf32, #tpu.memory_space<vmem>>, vector<1x128xf32>,
    %c1_i32 = arith.constant 1 : i32
    %38 = arith.index_cast %c1_i32 : i32 to index
    %c0_20 = arith.constant 0 : index
    %39 = vector.load %arg7[%38, %c0_20] : memref<8x512xf32, #tpu.memory_space<vmem>>, vector<1x512xf32>
    %c0_21 = arith.constant 0 : index
    %c0_22 = arith.constant 0 : index
    %40 = vector.load %arg2[%c0_21, %c0_22] : memref<128x512xf32, #tpu.memory_space<vmem>>, vector<128x512xf32>
    %cst_23 = arith.constant dense<0.000000e+00> : vector<1x512xf32>
    %41 = tpu.matmul %35, %40, %cst_23 {dimension_numbers = #tpu.dot_dimension_numbers<[1], [0], [0], [1], [0, 0, 1, 1], [], []>} : vector<1x128xf32>, vector<128x512xf32>, vector<1x512xf32> -> vector<1x512xf32>
    %42 = arith.addf %39, %41 : vector<1x512xf32>
    %43 = math.tanh %42 : vector<1x512xf32>
    %44 = vector.extract_strided_slice %43 {offsets = [0, 0], sizes = [1, 128], strides = [1, 1]} : vector<1x512xf32> to vector<1x128xf32>
    %cst_24 = arith.constant 5.000000e-01 : f32
    %45 = vector.broadcast %cst_24 : f32 to vector<1x128xf32>
    %46 = arith.mulf %45, %44 : vector<1x128xf32>
    %cst_25 = arith.constant 5.000000e-01 : f32
    %47 = vector.broadcast %cst_25 : f32 to vector<1x128xf32>
    %48 = arith.addf %46, %47 : vector<1x128xf32>
    %49 = vector.extract_strided_slice %43 {offsets = [0, 128], sizes = [1, 128], strides = [1, 1]} : vector<1x512xf32> to vector<1x128xf32>
    %cst_26 = arith.constant 5.000000e-01 : f32
    %50 = vector.broadcast %cst_26 : f32 to vector<1x128xf32>
    %51 = arith.mulf %50, %49 : vector<1x128xf32>
    %cst_27 = arith.constant 5.000000e-01 : f32
    %52 = vector.broadcast %cst_27 : f32 to vector<1x128xf32>
    %53 = arith.addf %51, %52 : vector<1x128xf32>
    %54 = vector.extract_strided_slice %43 {offsets = [0, 256], sizes = [1, 128], strides = [1, 1]} : vector<1x512xf32> to vector<1x128xf32>
    %55 = vector.extract_strided_slice %43 {offsets = [0, 384], sizes = [1, 128], strides = [1, 1]} : vector<1x512xf32> to vector<1x128xf32>
    %cst_28 = arith.constant 5.000000e-01 : f32
    %56 = vector.broadcast %cst_28 : f32 to vector<1x128xf32>
    %57 = arith.mulf %56, %55 : vector<1x128xf32>
    %cst_29 = arith.constant 5.000000e-01 : f32
    %58 = vector.broadcast %cst_29 : f32 to vector<1x128xf32>
    %59 = arith.addf %57, %58 : vector<1x128xf32>
    %60 = arith.mulf %53, %33 : vector<1x128xf32>
    %61 = arith.mulf %48, %54 : vector<1x128xf32>
    %62 = arith.addf %60, %61 : vector<1x128xf32>
    %63 = math.tanh %62 : vector<1x128xf32>
    %64 = arith.mulf %59, %63 : vector<1x128xf32>
    %65 = arith.index_cast %c1_i32 : i32 to index
    %c0_30 = arith.constant 0 : index
    %66 = vector.load %arg8[%65, %c0_30] : memref<8x128xf32, #tpu.memory_space<vmem>>, vector<1x128xf32>
    tpu.vector_store %arg8[%65, %c0_30], %64 {strides = array<i32>} : memref<8x128xf32, #tpu.memory_space<vmem>>, vector<1x128xf32>,
    %c2_i32 = arith.constant 2 : i32
    %67 = arith.index_cast %c2_i32 : i32 to index
    %c0_31 = arith.constant 0 : index
    %68 = vector.load %arg7[%67, %c0_31] : memref<8x512xf32, #tpu.memory_space<vmem>>, vector<1x512xf32>
    %c0_32 = arith.constant 0 : index
    %c0_33 = arith.constant 0 : index
    %69 = vector.load %arg2[%c0_32, %c0_33] : memref<128x512xf32, #tpu.memory_space<vmem>>, vector<128x512xf32>
    %cst_34 = arith.constant dense<0.000000e+00> : vector<1x512xf32>
    %70 = tpu.matmul %64, %69, %cst_34 {dimension_numbers = #tpu.dot_dimension_numbers<[1], [0], [0], [1], [0, 0, 1, 1], [], []>} : vector<1x128xf32>, vector<128x512xf32>, vector<1x512xf32> -> vector<1x512xf32>
    %71 = arith.addf %68, %70 : vector<1x512xf32>
    %72 = math.tanh %71 : vector<1x512xf32>
    %73 = vector.extract_strided_slice %72 {offsets = [0, 0], sizes = [1, 128], strides = [1, 1]} : vector<1x512xf32> to vector<1x128xf32>
    %cst_35 = arith.constant 5.000000e-01 : f32
    %74 = vector.broadcast %cst_35 : f32 to vector<1x128xf32>
    %75 = arith.mulf %74, %73 : vector<1x128xf32>
    %cst_36 = arith.constant 5.000000e-01 : f32
    %76 = vector.broadcast %cst_36 : f32 to vector<1x128xf32>
    %77 = arith.addf %75, %76 : vector<1x128xf32>
    %78 = vector.extract_strided_slice %72 {offsets = [0, 128], sizes = [1, 128], strides = [1, 1]} : vector<1x512xf32> to vector<1x128xf32>
    %cst_37 = arith.constant 5.000000e-01 : f32
    %79 = vector.broadcast %cst_37 : f32 to vector<1x128xf32>
    %80 = arith.mulf %79, %78 : vector<1x128xf32>
    %cst_38 = arith.constant 5.000000e-01 : f32
    %81 = vector.broadcast %cst_38 : f32 to vector<1x128xf32>
    %82 = arith.addf %80, %81 : vector<1x128xf32>
    %83 = vector.extract_strided_slice %72 {offsets = [0, 256], sizes = [1, 128], strides = [1, 1]} : vector<1x512xf32> to vector<1x128xf32>
    %84 = vector.extract_strided_slice %72 {offsets = [0, 384], sizes = [1, 128], strides = [1, 1]} : vector<1x512xf32> to vector<1x128xf32>
    %cst_39 = arith.constant 5.000000e-01 : f32
    %85 = vector.broadcast %cst_39 : f32 to vector<1x128xf32>
    %86 = arith.mulf %85, %84 : vector<1x128xf32>
    %cst_40 = arith.constant 5.000000e-01 : f32
    %87 = vector.broadcast %cst_40 : f32 to vector<1x128xf32>
    %88 = arith.addf %86, %87 : vector<1x128xf32>
    %89 = arith.mulf %82, %62 : vector<1x128xf32>
    %90 = arith.mulf %77, %83 : vector<1x128xf32>
    %91 = arith.addf %89, %90 : vector<1x128xf32>
    %92 = math.tanh %91 : vector<1x128xf32>
    %93 = arith.mulf %88, %92 : vector<1x128xf32>
    %94 = arith.index_cast %c2_i32 : i32 to index
    %c0_41 = arith.constant 0 : index
    %95 = vector.load %arg8[%94, %c0_41] : memref<8x128xf32, #tpu.memory_space<vmem>>, vector<1x128xf32>
    tpu.vector_store %arg8[%94, %c0_41], %93 {strides = array<i32>} : memref<8x128xf32, #tpu.memory_space<vmem>>, vector<1x128xf32>,
    %c3_i32 = arith.constant 3 : i32
    %96 = arith.index_cast %c3_i32 : i32 to index
    %c0_42 = arith.constant 0 : index
    %97 = vector.load %arg7[%96, %c0_42] : memref<8x512xf32, #tpu.memory_space<vmem>>, vector<1x512xf32>
    %c0_43 = arith.constant 0 : index
    %c0_44 = arith.constant 0 : index
    %98 = vector.load %arg2[%c0_43, %c0_44] : memref<128x512xf32, #tpu.memory_space<vmem>>, vector<128x512xf32>
    %cst_45 = arith.constant dense<0.000000e+00> : vector<1x512xf32>
    %99 = tpu.matmul %93, %98, %cst_45 {dimension_numbers = #tpu.dot_dimension_numbers<[1], [0], [0], [1], [0, 0, 1, 1], [], []>} : vector<1x128xf32>, vector<128x512xf32>, vector<1x512xf32> -> vector<1x512xf32>
    %100 = arith.addf %97, %99 : vector<1x512xf32>
    %101 = math.tanh %100 : vector<1x512xf32>
    %102 = vector.extract_strided_slice %101 {offsets = [0, 0], sizes = [1, 128], strides = [1, 1]} : vector<1x512xf32> to vector<1x128xf32>
    %cst_46 = arith.constant 5.000000e-01 : f32
    %103 = vector.broadcast %cst_46 : f32 to vector<1x128xf32>
    %104 = arith.mulf %103, %102 : vector<1x128xf32>
    %cst_47 = arith.constant 5.000000e-01 : f32
    %105 = vector.broadcast %cst_47 : f32 to vector<1x128xf32>
    %106 = arith.addf %104, %105 : vector<1x128xf32>
    %107 = vector.extract_strided_slice %101 {offsets = [0, 128], sizes = [1, 128], strides = [1, 1]} : vector<1x512xf32> to vector<1x128xf32>
    %cst_48 = arith.constant 5.000000e-01 : f32
    %108 = vector.broadcast %cst_48 : f32 to vector<1x128xf32>
    %109 = arith.mulf %108, %107 : vector<1x128xf32>
    %cst_49 = arith.constant 5.000000e-01 : f32
    %110 = vector.broadcast %cst_49 : f32 to vector<1x128xf32>
    %111 = arith.addf %109, %110 : vector<1x128xf32>
    %112 = vector.extract_strided_slice %101 {offsets = [0, 256], sizes = [1, 128], strides = [1, 1]} : vector<1x512xf32> to vector<1x128xf32>
    %113 = vector.extract_strided_slice %101 {offsets = [0, 384], sizes = [1, 128], strides = [1, 1]} : vector<1x512xf32> to vector<1x128xf32>
    %cst_50 = arith.constant 5.000000e-01 : f32
    %114 = vector.broadcast %cst_50 : f32 to vector<1x128xf32>
    %115 = arith.mulf %114, %113 : vector<1x128xf32>
    %cst_51 = arith.constant 5.000000e-01 : f32
    %116 = vector.broadcast %cst_51 : f32 to vector<1x128xf32>
    %117 = arith.addf %115, %116 : vector<1x128xf32>
    %118 = arith.mulf %111, %91 : vector<1x128xf32>
    %119 = arith.mulf %106, %112 : vector<1x128xf32>
    %120 = arith.addf %118, %119 : vector<1x128xf32>
    %121 = math.tanh %120 : vector<1x128xf32>
    %122 = arith.mulf %117, %121 : vector<1x128xf32>
    %123 = arith.index_cast %c3_i32 : i32 to index
    %c0_52 = arith.constant 0 : index
    %124 = vector.load %arg8[%123, %c0_52] : memref<8x128xf32, #tpu.memory_space<vmem>>, vector<1x128xf32>
    tpu.vector_store %arg8[%123, %c0_52], %122 {strides = array<i32>} : memref<8x128xf32, #tpu.memory_space<vmem>>, vector<1x128xf32>,
    %c4_i32 = arith.constant 4 : i32
    %125 = arith.index_cast %c4_i32 : i32 to index
    %c0_53 = arith.constant 0 : index
    %126 = vector.load %arg7[%125, %c0_53] : memref<8x512xf32, #tpu.memory_space<vmem>>, vector<1x512xf32>
    %c0_54 = arith.constant 0 : index
    %c0_55 = arith.constant 0 : index
    %127 = vector.load %arg2[%c0_54, %c0_55] : memref<128x512xf32, #tpu.memory_space<vmem>>, vector<128x512xf32>
    %cst_56 = arith.constant dense<0.000000e+00> : vector<1x512xf32>
    %128 = tpu.matmul %122, %127, %cst_56 {dimension_numbers = #tpu.dot_dimension_numbers<[1], [0], [0], [1], [0, 0, 1, 1], [], []>} : vector<1x128xf32>, vector<128x512xf32>, vector<1x512xf32> -> vector<1x512xf32>
    %129 = arith.addf %126, %128 : vector<1x512xf32>
    %130 = math.tanh %129 : vector<1x512xf32>
    %131 = vector.extract_strided_slice %130 {offsets = [0, 0], sizes = [1, 128], strides = [1, 1]} : vector<1x512xf32> to vector<1x128xf32>
    %cst_57 = arith.constant 5.000000e-01 : f32
    %132 = vector.broadcast %cst_57 : f32 to vector<1x128xf32>
    %133 = arith.mulf %132, %131 : vector<1x128xf32>
    %cst_58 = arith.constant 5.000000e-01 : f32
    %134 = vector.broadcast %cst_58 : f32 to vector<1x128xf32>
    %135 = arith.addf %133, %134 : vector<1x128xf32>
    %136 = vector.extract_strided_slice %130 {offsets = [0, 128], sizes = [1, 128], strides = [1, 1]} : vector<1x512xf32> to vector<1x128xf32>
    %cst_59 = arith.constant 5.000000e-01 : f32
    %137 = vector.broadcast %cst_59 : f32 to vector<1x128xf32>
    %138 = arith.mulf %137, %136 : vector<1x128xf32>
    %cst_60 = arith.constant 5.000000e-01 : f32
    %139 = vector.broadcast %cst_60 : f32 to vector<1x128xf32>
    %140 = arith.addf %138, %139 : vector<1x128xf32>
    %141 = vector.extract_strided_slice %130 {offsets = [0, 256], sizes = [1, 128], strides = [1, 1]} : vector<1x512xf32> to vector<1x128xf32>
    %142 = vector.extract_strided_slice %130 {offsets = [0, 384], sizes = [1, 128], strides = [1, 1]} : vector<1x512xf32> to vector<1x128xf32>
    %cst_61 = arith.constant 5.000000e-01 : f32
    %143 = vector.broadcast %cst_61 : f32 to vector<1x128xf32>
    %144 = arith.mulf %143, %142 : vector<1x128xf32>
    %cst_62 = arith.constant 5.000000e-01 : f32
    %145 = vector.broadcast %cst_62 : f32 to vector<1x128xf32>
    %146 = arith.addf %144, %145 : vector<1x128xf32>
    %147 = arith.mulf %140, %120 : vector<1x128xf32>
    %148 = arith.mulf %135, %141 : vector<1x128xf32>
    %149 = arith.addf %147, %148 : vector<1x128xf32>
    %150 = math.tanh %149 : vector<1x128xf32>
    %151 = arith.mulf %146, %150 : vector<1x128xf32>
    %152 = arith.index_cast %c4_i32 : i32 to index
    %c0_63 = arith.constant 0 : index
    %153 = vector.load %arg8[%152, %c0_63] : memref<8x128xf32, #tpu.memory_space<vmem>>, vector<1x128xf32>
    tpu.vector_store %arg8[%152, %c0_63], %151 {strides = array<i32>} : memref<8x128xf32, #tpu.memory_space<vmem>>, vector<1x128xf32>,
    %c5_i32 = arith.constant 5 : i32
    %154 = arith.index_cast %c5_i32 : i32 to index
    %c0_64 = arith.constant 0 : index
    %155 = vector.load %arg7[%154, %c0_64] : memref<8x512xf32, #tpu.memory_space<vmem>>, vector<1x512xf32>
    %c0_65 = arith.constant 0 : index
    %c0_66 = arith.constant 0 : index
    %156 = vector.load %arg2[%c0_65, %c0_66] : memref<128x512xf32, #tpu.memory_space<vmem>>, vector<128x512xf32>
    %cst_67 = arith.constant dense<0.000000e+00> : vector<1x512xf32>
    %157 = tpu.matmul %151, %156, %cst_67 {dimension_numbers = #tpu.dot_dimension_numbers<[1], [0], [0], [1], [0, 0, 1, 1], [], []>} : vector<1x128xf32>, vector<128x512xf32>, vector<1x512xf32> -> vector<1x512xf32>
    %158 = arith.addf %155, %157 : vector<1x512xf32>
    %159 = math.tanh %158 : vector<1x512xf32>
    %160 = vector.extract_strided_slice %159 {offsets = [0, 0], sizes = [1, 128], strides = [1, 1]} : vector<1x512xf32> to vector<1x128xf32>
    %cst_68 = arith.constant 5.000000e-01 : f32
    %161 = vector.broadcast %cst_68 : f32 to vector<1x128xf32>
    %162 = arith.mulf %161, %160 : vector<1x128xf32>
    %cst_69 = arith.constant 5.000000e-01 : f32
    %163 = vector.broadcast %cst_69 : f32 to vector<1x128xf32>
    %164 = arith.addf %162, %163 : vector<1x128xf32>
    %165 = vector.extract_strided_slice %159 {offsets = [0, 128], sizes = [1, 128], strides = [1, 1]} : vector<1x512xf32> to vector<1x128xf32>
    %cst_70 = arith.constant 5.000000e-01 : f32
    %166 = vector.broadcast %cst_70 : f32 to vector<1x128xf32>
    %167 = arith.mulf %166, %165 : vector<1x128xf32>
    %cst_71 = arith.constant 5.000000e-01 : f32
    %168 = vector.broadcast %cst_71 : f32 to vector<1x128xf32>
    %169 = arith.addf %167, %168 : vector<1x128xf32>
    %170 = vector.extract_strided_slice %159 {offsets = [0, 256], sizes = [1, 128], strides = [1, 1]} : vector<1x512xf32> to vector<1x128xf32>
    %171 = vector.extract_strided_slice %159 {offsets = [0, 384], sizes = [1, 128], strides = [1, 1]} : vector<1x512xf32> to vector<1x128xf32>
    %cst_72 = arith.constant 5.000000e-01 : f32
    %172 = vector.broadcast %cst_72 : f32 to vector<1x128xf32>
    %173 = arith.mulf %172, %171 : vector<1x128xf32>
    %cst_73 = arith.constant 5.000000e-01 : f32
    %174 = vector.broadcast %cst_73 : f32 to vector<1x128xf32>
    %175 = arith.addf %173, %174 : vector<1x128xf32>
    %176 = arith.mulf %169, %149 : vector<1x128xf32>
    %177 = arith.mulf %164, %170 : vector<1x128xf32>
    %178 = arith.addf %176, %177 : vector<1x128xf32>
    %179 = math.tanh %178 : vector<1x128xf32>
    %180 = arith.mulf %175, %179 : vector<1x128xf32>
    %181 = arith.index_cast %c5_i32 : i32 to index
    %c0_74 = arith.constant 0 : index
    %182 = vector.load %arg8[%181, %c0_74] : memref<8x128xf32, #tpu.memory_space<vmem>>, vector<1x128xf32>
    tpu.vector_store %arg8[%181, %c0_74], %180 {strides = array<i32>} : memref<8x128xf32, #tpu.memory_space<vmem>>, vector<1x128xf32>,
    %c6_i32 = arith.constant 6 : i32
    %183 = arith.index_cast %c6_i32 : i32 to index
    %c0_75 = arith.constant 0 : index
    %184 = vector.load %arg7[%183, %c0_75] : memref<8x512xf32, #tpu.memory_space<vmem>>, vector<1x512xf32>
    %c0_76 = arith.constant 0 : index
    %c0_77 = arith.constant 0 : index
    %185 = vector.load %arg2[%c0_76, %c0_77] : memref<128x512xf32, #tpu.memory_space<vmem>>, vector<128x512xf32>
    %cst_78 = arith.constant dense<0.000000e+00> : vector<1x512xf32>
    %186 = tpu.matmul %180, %185, %cst_78 {dimension_numbers = #tpu.dot_dimension_numbers<[1], [0], [0], [1], [0, 0, 1, 1], [], []>} : vector<1x128xf32>, vector<128x512xf32>, vector<1x512xf32> -> vector<1x512xf32>
    %187 = arith.addf %184, %186 : vector<1x512xf32>
    %188 = math.tanh %187 : vector<1x512xf32>
    %189 = vector.extract_strided_slice %188 {offsets = [0, 0], sizes = [1, 128], strides = [1, 1]} : vector<1x512xf32> to vector<1x128xf32>
    %cst_79 = arith.constant 5.000000e-01 : f32
    %190 = vector.broadcast %cst_79 : f32 to vector<1x128xf32>
    %191 = arith.mulf %190, %189 : vector<1x128xf32>
    %cst_80 = arith.constant 5.000000e-01 : f32
    %192 = vector.broadcast %cst_80 : f32 to vector<1x128xf32>
    %193 = arith.addf %191, %192 : vector<1x128xf32>
    %194 = vector.extract_strided_slice %188 {offsets = [0, 128], sizes = [1, 128], strides = [1, 1]} : vector<1x512xf32> to vector<1x128xf32>
    %cst_81 = arith.constant 5.000000e-01 : f32
    %195 = vector.broadcast %cst_81 : f32 to vector<1x128xf32>
    %196 = arith.mulf %195, %194 : vector<1x128xf32>
    %cst_82 = arith.constant 5.000000e-01 : f32
    %197 = vector.broadcast %cst_82 : f32 to vector<1x128xf32>
    %198 = arith.addf %196, %197 : vector<1x128xf32>
    %199 = vector.extract_strided_slice %188 {offsets = [0, 256], sizes = [1, 128], strides = [1, 1]} : vector<1x512xf32> to vector<1x128xf32>
    %200 = vector.extract_strided_slice %188 {offsets = [0, 384], sizes = [1, 128], strides = [1, 1]} : vector<1x512xf32> to vector<1x128xf32>
    %cst_83 = arith.constant 5.000000e-01 : f32
    %201 = vector.broadcast %cst_83 : f32 to vector<1x128xf32>
    %202 = arith.mulf %201, %200 : vector<1x128xf32>
    %cst_84 = arith.constant 5.000000e-01 : f32
    %203 = vector.broadcast %cst_84 : f32 to vector<1x128xf32>
    %204 = arith.addf %202, %203 : vector<1x128xf32>
    %205 = arith.mulf %198, %178 : vector<1x128xf32>
    %206 = arith.mulf %193, %199 : vector<1x128xf32>
    %207 = arith.addf %205, %206 : vector<1x128xf32>
    %208 = math.tanh %207 : vector<1x128xf32>
    %209 = arith.mulf %204, %208 : vector<1x128xf32>
    %210 = arith.index_cast %c6_i32 : i32 to index
    %c0_85 = arith.constant 0 : index
    %211 = vector.load %arg8[%210, %c0_85] : memref<8x128xf32, #tpu.memory_space<vmem>>, vector<1x128xf32>
    tpu.vector_store %arg8[%210, %c0_85], %209 {strides = array<i32>} : memref<8x128xf32, #tpu.memory_space<vmem>>, vector<1x128xf32>,
    %c7_i32 = arith.constant 7 : i32
    %212 = arith.index_cast %c7_i32 : i32 to index
    %c0_86 = arith.constant 0 : index
    %213 = vector.load %arg7[%212, %c0_86] : memref<8x512xf32, #tpu.memory_space<vmem>>, vector<1x512xf32>
    %c0_87 = arith.constant 0 : index
    %c0_88 = arith.constant 0 : index
    %214 = vector.load %arg2[%c0_87, %c0_88] : memref<128x512xf32, #tpu.memory_space<vmem>>, vector<128x512xf32>
    %cst_89 = arith.constant dense<0.000000e+00> : vector<1x512xf32>
    %215 = tpu.matmul %209, %214, %cst_89 {dimension_numbers = #tpu.dot_dimension_numbers<[1], [0], [0], [1], [0, 0, 1, 1], [], []>} : vector<1x128xf32>, vector<128x512xf32>, vector<1x512xf32> -> vector<1x512xf32>
    %216 = arith.addf %213, %215 : vector<1x512xf32>
    %217 = math.tanh %216 : vector<1x512xf32>
    %218 = vector.extract_strided_slice %217 {offsets = [0, 0], sizes = [1, 128], strides = [1, 1]} : vector<1x512xf32> to vector<1x128xf32>
    %cst_90 = arith.constant 5.000000e-01 : f32
    %219 = vector.broadcast %cst_90 : f32 to vector<1x128xf32>
    %220 = arith.mulf %219, %218 : vector<1x128xf32>
    %cst_91 = arith.constant 5.000000e-01 : f32
    %221 = vector.broadcast %cst_91 : f32 to vector<1x128xf32>
    %222 = arith.addf %220, %221 : vector<1x128xf32>
    %223 = vector.extract_strided_slice %217 {offsets = [0, 128], sizes = [1, 128], strides = [1, 1]} : vector<1x512xf32> to vector<1x128xf32>
    %cst_92 = arith.constant 5.000000e-01 : f32
    %224 = vector.broadcast %cst_92 : f32 to vector<1x128xf32>
    %225 = arith.mulf %224, %223 : vector<1x128xf32>
    %cst_93 = arith.constant 5.000000e-01 : f32
    %226 = vector.broadcast %cst_93 : f32 to vector<1x128xf32>
    %227 = arith.addf %225, %226 : vector<1x128xf32>
    %228 = vector.extract_strided_slice %217 {offsets = [0, 256], sizes = [1, 128], strides = [1, 1]} : vector<1x512xf32> to vector<1x128xf32>
    %229 = vector.extract_strided_slice %217 {offsets = [0, 384], sizes = [1, 128], strides = [1, 1]} : vector<1x512xf32> to vector<1x128xf32>
    %cst_94 = arith.constant 5.000000e-01 : f32
    %230 = vector.broadcast %cst_94 : f32 to vector<1x128xf32>
    %231 = arith.mulf %230, %229 : vector<1x128xf32>
    %cst_95 = arith.constant 5.000000e-01 : f32
    %232 = vector.broadcast %cst_95 : f32 to vector<1x128xf32>
    %233 = arith.addf %231, %232 : vector<1x128xf32>
    %234 = arith.mulf %227, %207 : vector<1x128xf32>
    %235 = arith.mulf %222, %228 : vector<1x128xf32>
    %236 = arith.addf %234, %235 : vector<1x128xf32>
    %237 = math.tanh %236 : vector<1x128xf32>
    %238 = arith.mulf %233, %237 : vector<1x128xf32>
    %239 = arith.index_cast %c7_i32 : i32 to index
    %c0_96 = arith.constant 0 : index
    %240 = vector.load %arg8[%239, %c0_96] : memref<8x128xf32, #tpu.memory_space<vmem>>, vector<1x128xf32>
    tpu.vector_store %arg8[%239, %c0_96], %238 {strides = array<i32>} : memref<8x128xf32, #tpu.memory_space<vmem>>, vector<1x128xf32>,
    %c8_i32 = arith.constant 8 : i32
    %c0_97 = arith.constant 0 : index
    %c0_98 = arith.constant 0 : index
    %241 = vector.load %arg8[%c0_97, %c0_98] : memref<8x128xf32, #tpu.memory_space<vmem>>, vector<8x128xf32>
    %c0_99 = arith.constant 0 : index
    %c0_100 = arith.constant 0 : index
    %242 = vector.load %arg4[%c0_99, %c0_100] : memref<128x8xf32, #tpu.memory_space<vmem>>, vector<128x8xf32>
    %cst_101 = arith.constant dense<0.000000e+00> : vector<8x8xf32>
    %243 = tpu.matmul %241, %242, %cst_101 {dimension_numbers = #tpu.dot_dimension_numbers<[1], [0], [0], [1], [0, 0, 1, 1], [], []>} : vector<8x128xf32>, vector<128x8xf32>, vector<8x8xf32> -> vector<8x8xf32>
    %c0_102 = arith.constant 0 : index
    %c0_103 = arith.constant 0 : index
    %244 = vector.load %arg5[%c0_102, %c0_103] : memref<1x8xf32, #tpu.memory_space<vmem>>, vector<1x8xf32>
    %245 = vector.broadcast %244 : vector<1x8xf32> to vector<8x8xf32>
    %246 = arith.addf %243, %245 : vector<8x8xf32>
    %cst_104 = arith.constant dense<0xFF800000> : vector<8xf32>
    %247 = vector.multi_reduction <maximumf>, %246, %cst_104 [1] : vector<8x8xf32> to vector<8xf32>
    %248 = vector.shape_cast %247 : vector<8xf32> to vector<8x1xf32>
    %249 = vector.broadcast %248 : vector<8x1xf32> to vector<8x8xf32>
    %250 = arith.subf %246, %249 : vector<8x8xf32>
    %251 = math.exp %250 : vector<8x8xf32>
    %cst_105 = arith.constant dense<0.000000e+00> : vector<8xf32>
    %252 = vector.multi_reduction <add>, %251, %cst_105 [1] : vector<8x8xf32> to vector<8xf32>
    %253 = vector.shape_cast %252 : vector<8xf32> to vector<8x1xf32>
    %254 = math.log %253 : vector<8x1xf32>
    %255 = arith.addf %254, %248 : vector<8x1xf32>
    %256 = vector.broadcast %255 : vector<8x1xf32> to vector<8x8xf32>
    %257 = arith.subf %246, %256 : vector<8x8xf32>
    %c0_106 = arith.constant 0 : index
    %c0_107 = arith.constant 0 : index
    %258 = vector.load %arg6[%c0_106, %c0_107] : memref<8x8xf32, #tpu.memory_space<vmem>>, vector<8x8xf32>
    tpu.vector_store %arg6[%c0_106, %c0_107], %257 {strides = array<i32>} : memref<8x8xf32, #tpu.memory_space<vmem>>, vector<8x8xf32>,
    return
  }
}

</mosaic_0001>

<llo_original>
// kernel: tpu_custom_call.1
$region0: #{tpu_custom_call.1}
  #allocation0 [shape = 'u32[]', space=smem, size = 0x4, offset = 0x4, fixed_abs, tag = 'smem constant byte address 0x4 - core index']
  #allocation1 [shape = 'u32[144,128]{1,0:T(1,128)}', space=vmem, size = 0x12000, scoped, tag = 'internal scratch']
  #allocation2 [shape = 'f32[8,512]{1,0:T(8,128)}', space=vmem, size = 0x4000, scoped, tag = 'scratch operand']
  #allocation3 [shape = 'f32[8,128]{1,0:T(8,128)}', space=vmem, size = 0x1000, scoped, tag = 'scratch operand']
  %s0 = inlined_call_operand.vmem [shape: f32[8,32], index: 0, kind: input, shape index: {}]
  %s1 = inlined_call_operand.vmem [shape: f32[32,512], index: 1, kind: input, shape index: {}]
  %s2 = inlined_call_operand.hbm [shape: f32[128,512], index: 2, kind: input, shape index: {}]
  %s3 = inlined_call_operand.vmem [shape: f32[1,512], index: 3, kind: input, shape index: {}]
  %s4 = inlined_call_operand.vmem [shape: f32[128,8], index: 4, kind: input, shape index: {}]
  %s5 = inlined_call_operand.vmem [shape: f32[1,8], index: 5, kind: input, shape index: {}]
  %s6 = inlined_call_operand.hbm [shape: f32[8,8], index: 6, kind: output, shape index: {}]
  %s7 = sld [smem:[#allocation0]]
  $region38: #{tpu_custom_call.1} parent=0
    _
  %s9 = ssub.s32 1, %s7
  %s10 = scalar_select 0, %s9, %s7
  $region1: #{tpu_custom_call.1} parent=0
    #allocation4 [shape = 'u8[262144]{0}', space=vmem, size = 0x40000, scoped, tag = 'input window, operand 2, single buffered']
    #allocation5 [shape = 's32[1]{0}', space=sflag, size = 0x4, scoped, tag = 'scoped memory for tpu_custom_call.1']
    #allocation6 [shape = 's32[1]{0}', space=sflag, size = 0x4, scoped, tag = 'scoped memory for tpu_custom_call.1']
    #allocation7 [shape = 'u8[4096]{0}', space=vmem, size = 0x1000, scoped, tag = 'output window, operand 0, single buffered']
    %11 = vsyncpa [#allocation5], 0
    %12 = vsyncpa [#allocation6], 0
    // Predicated region
    $region2: #{tpu_custom_call.1} parent=1 // pred_check
      _
    $region3: #{tpu_custom_call.1} parent=1 // pred_check_branch
      %14 = sbr.rel (0) target = $region5
    $region4: #{tpu_custom_call.1} parent=1 // pred_region
      _
    $region5: #{tpu_custom_call.1} parent=1 // pred_fallthru
      _
    // Predicated region
    $region6: #{tpu_custom_call.1} parent=1 // pred_check
      _
    $region7: #{tpu_custom_call.1} parent=1 // pred_check_branch
      %16 = sbr.rel (0) target = $region9
    $region8: #{tpu_custom_call.1} parent=1 // pred_region
      _
    $region9: #{tpu_custom_call.1} parent=1 // pred_fallthru
      _
    // Predicated region
    $region10: #{tpu_custom_call.1} parent=1 // pred_check
      _
    $region11: #{tpu_custom_call.1} parent=1 // pred_check_branch
      %18 = sbr.rel (0) target = $region13
    $region12: #{tpu_custom_call.1} parent=1 // pred_region
      %s20 = ssub.s32 8192, 8192
      %21 = vsyncadd [#allocation5], %s20
      %s22 = sshll.u32 [#allocation4], 4
      %s23 = int_to_ptr.vmem [resolvable:$true] %s22
      %28 = dma.hbm_to_vmem [thread:$0]  %s2, 8192, %s23, [#allocation5], 512, 512, 32
    $region13: #{tpu_custom_call.1} parent=1 // pred_fallthru
      _
    // Predicated region
    $region14: #{tpu_custom_call.1} parent=1 // pred_check
      _
    $region15: #{tpu_custom_call.1} parent=1 // pred_check_branch
      %30 = sbr.rel (0) target = $region17
    $region16: #{tpu_custom_call.1} parent=1 // pred_region
      _
    $region17: #{tpu_custom_call.1} parent=1 // pred_fallthru
      _
    // Predicated region
    $region18: #{tpu_custom_call.1} parent=1 // pred_check
      _
    $region19: #{tpu_custom_call.1} parent=1 // pred_check_branch
      %32 = sbr.rel (0) target = $region21
    $region20: #{tpu_custom_call.1} parent=1 // pred_region
      _
    $region21: #{tpu_custom_call.1} parent=1 // pred_fallthru
      _
    // Predicated region
    $region22: #{tpu_custom_call.1} parent=1 // pred_check
      _
    $region23: #{tpu_custom_call.1} parent=1 // pred_check_branch
      %34 = sbr.rel (0) target = $region25
    $region24: #{tpu_custom_call.1} parent=1 // pred_region
      _
    $region25: #{tpu_custom_call.1} parent=1 // pred_fallthru
      _
    // Predicated region
    $region26: #{tpu_custom_call.1} parent=1 // pred_check
      _
    $region27: #{tpu_custom_call.1} parent=1 // pred_check_branch
      %36 = sbr.rel (0) target = $region29
    $region28: #{tpu_custom_call.1} parent=1 // pred_region
      %37 = dma.done [#allocation5], 8192
    $region29: #{tpu_custom_call.1} parent=1 // pred_fallthru
      _
    %v38 = vld [vmem:[%s0] sm:$0xff]
    %v39 = vld [vmem:[%s1] sm:$0xff]
    %v40 = vld [vmem:[%s1 + $0x8] sm:$0xff]
    %v41 = vld [vmem:[%s1 + $0x10] sm:$0xff]
    %v42 = vld [vmem:[%s1 + $0x18] sm:$0xff]
    %v43 = vld [vmem:[%s1 + $0x20] sm:$0xff]
    %v44 = vld [vmem:[%s1 + $0x28] sm:$0xff]
    %v45 = vld [vmem:[%s1 + $0x30] sm:$0xff]
    %v46 = vld [vmem:[%s1 + $0x38] sm:$0xff]
    %v47 = vld [vmem:[%s1 + $0x40] sm:$0xff]
    %v48 = vld [vmem:[%s1 + $0x48] sm:$0xff]
    %v49 = vld [vmem:[%s1 + $0x50] sm:$0xff]
    %v50 = vld [vmem:[%s1 + $0x58] sm:$0xff]
    %v51 = vld [vmem:[%s1 + $0x60] sm:$0xff]
    %v52 = vld [vmem:[%s1 + $0x68] sm:$0xff]
    %v53 = vld [vmem:[%s1 + $0x70] sm:$0xff]
    %v54 = vld [vmem:[%s1 + $0x78] sm:$0xff]
    %v55 = vld [vmem:[%s3] sm:$0xf]
    %v57 = vlaneseq
    %v58 = vshrl.u32 %v57, 7
    %v59 = vsub.s32 0, %v58
    %v60 = vrot.slane %v55, %v59
    %v61 = vlaneseq
    %v62 = vshrl.u32 %v61, 7
    %v63 = vsub.s32 1, %v62
    %v64 = vrot.slane %v55, %v63
    %v65 = vlaneseq
    %v66 = vshrl.u32 %v65, 7
    %v67 = vsub.s32 2, %v66
    %v68 = vrot.slane %v55, %v67
    %v69 = vlaneseq
    %v70 = vshrl.u32 %v69, 7
    %v71 = vsub.s32 3, %v70
    %v72 = vrot.slane %v55, %v71
    %vm77 = vcmask 261120
    %v79 = vsel %vm77, %v38, 0
    %81 = vmatprep.subr.mxu0 0.0
    %82 = vmatpush1.msra.mxu0 0.0
    %83 = vmatprep.subr.mxu0 0.0
    %84 = vmatpush1.msra.mxu0 0.0
    %85 = vmatprep.subr.mxu0 0.0
    %86 = vmatpush1.msra.mxu0 0.0
    %87 = vmatprep.subr.mxu0 0.0
    %88 = vmatpush1.msra.mxu0 0.0
    %89 = vmatprep.subr.mxu0 0.0
    %90 = vmatpush1.msra.mxu0 0.0
    %91 = vmatprep.subr.mxu0 0.0
    %92 = vmatpush1.msra.mxu0 0.0
    %93 = vmatprep.subr.mxu0 0.0
    %94 = vmatpush1.msra.mxu0 0.0
    %95 = vmatprep.subr.mxu0 0.0
    %96 = vmatpush1.msra.mxu0 0.0
    %97 = vmatprep.subr.mxu0 0.0
    %98 = vmatpush1.msra.mxu0 0.0
    %99 = vmatprep.subr.mxu0 0.0
    %100 = vmatpush1.msra.mxu0 0.0
    %101 = vmatprep.subr.mxu0 0.0
    %102 = vmatpush1.msra.mxu0 0.0
    %103 = vmatprep.subr.mxu0 0.0
    %104 = vmatpush1.msra.mxu0 0.0
    %105 = vmatprep.subr.mxu0 %v52
    %106 = vmatpush1.msra.mxu0 %v51
    %107 = vmatprep.subr.mxu0 %v48
    %108 = vmatpush1.msra.mxu0 %v47
    %109 = vmatprep.subr.mxu0 %v44
    %110 = vmatpush1.msra.mxu0 %v43
    %111 = vmatprep.subr.mxu0 %v40
    %112 = vmatpush1.msra.mxu0 %v39
    %113 = vmatprep.subr.mxu0 0.0
    %114 = vmatpush2.msra.mxu0 0.0
    %115 = vmatprep.subr.mxu0 0.0
    %116 = vmatpush2.msra.mxu0 0.0
    %117 = vmatprep.subr.mxu0 0.0
    %118 = vmatpush2.msra.mxu0 0.0
    %119 = vmatprep.subr.mxu0 0.0
    %120 = vmatpush2.msra.mxu0 0.0
    %121 = vmatprep.subr.mxu0 0.0
    %122 = vmatpush2.msra.mxu0 0.0
    %123 = vmatprep.subr.mxu0 0.0
    %124 = vmatpush2.msra.mxu0 0.0
    %125 = vmatprep.subr.mxu0 0.0
    %126 = vmatpush2.msra.mxu0 0.0
    %127 = vmatprep.subr.mxu0 0.0
    %128 = vmatpush2.msra.mxu0 0.0
    %129 = vmatprep.subr.mxu0 0.0
    %130 = vmatpush2.msra.mxu0 0.0
    %131 = vmatprep.subr.mxu0 0.0
    %132 = vmatpush2.msra.mxu0 0.0
    %133 = vmatprep.subr.mxu0 0.0
    %134 = vmatpush2.msra.mxu0 0.0
    %135 = vmatprep.subr.mxu0 0.0
    %136 = vmatpush2.msra.mxu0 0.0
    %137 = vmatprep.subr.mxu0 0.0
    %138 = vmatpush2.msra.mxu0 0.0
    %139 = vmatprep.subr.mxu0 0.0
    %140 = vmatpush2.msra.mxu0 0.0
    %141 = vmatprep.subr.mxu0 0.0
    %142 = vmatpush2.msra.mxu0 0.0
    %143 = vmatprep.subr.mxu0 0.0
    %144 = vmatpush2.msra.mxu0 0.0
    %145 = vmatprep.mubr.f32.mxu0 0.0
    %146 = vmatmul.mubr.f32.gmra.mxu0 %v79
    %v147 = vpop.f32.mrf.mxu0
    %v148 = vadd.f32 %v60, %v147
    %v149 = vpop.f32.mrf.mxu0
    %v150 = vadd.f32 %v64, %v149
    %151 = vdwg.mxu0
    %152 = vmatprep.subr.mxu0 0.0
    %153 = vmatpush1.msra.mxu0 0.0
    %154 = vmatprep.subr.mxu0 0.0
    %155 = vmatpush1.msra.mxu0 0.0
    %156 = vmatprep.subr.mxu0 0.0
    %157 = vmatpush1.msra.mxu0 0.0
    %158 = vmatprep.subr.mxu0 0.0
    %159 = vmatpush1.msra.mxu0 0.0
    %160 = vmatprep.subr.mxu0 0.0
    %161 = vmatpush1.msra.mxu0 0.0
    %162 = vmatprep.subr.mxu0 0.0
    %163 = vmatpush1.msra.mxu0 0.0
    %164 = vmatprep.subr.mxu0 0.0
    %165 = vmatpush1.msra.mxu0 0.0
    %166 = vmatprep.subr.mxu0 0.0
    %167 = vmatpush1.msra.mxu0 0.0
    %168 = vmatprep.subr.mxu0 0.0
    %169 = vmatpush1.msra.mxu0 0.0
    %170 = vmatprep.subr.mxu0 0.0
    %171 = vmatpush1.msra.mxu0 0.0
    %172 = vmatprep.subr.mxu0 0.0
    %173 = vmatpush1.msra.mxu0 0.0
    %174 = vmatprep.subr.mxu0 0.0
    %175 = vmatpush1.msra.mxu0 0.0
    %176 = vmatprep.subr.mxu0 %v54
    %177 = vmatpush1.msra.mxu0 %v53
    %178 = vmatprep.subr.mxu0 %v50
    %179 = vmatpush1.msra.mxu0 %v49
    %180 = vmatprep.subr.mxu0 %v46
    %181 = vmatpush1.msra.mxu0 %v45
    %182 = vmatprep.subr.mxu0 %v42
    %183 = vmatpush1.msra.mxu0 %v41
    %184 = vmatprep.subr.mxu0 0.0
    %185 = vmatpush2.msra.mxu0 0.0
    %186 = vmatprep.subr.mxu0 0.0
    %187 = vmatpush2.msra.mxu0 0.0
    %188 = vmatprep.subr.mxu0 0.0
    %189 = vmatpush2.msra.mxu0 0.0
    %190 = vmatprep.subr.mxu0 0.0
    %191 = vmatpush2.msra.mxu0 0.0
    %192 = vmatprep.subr.mxu0 0.0
    %193 = vmatpush2.msra.mxu0 0.0
    %194 = vmatprep.subr.mxu0 0.0
    %195 = vmatpush2.msra.mxu0 0.0
    %196 = vmatprep.subr.mxu0 0.0
    %197 = vmatpush2.msra.mxu0 0.0
    %198 = vmatprep.subr.mxu0 0.0
    %199 = vmatpush2.msra.mxu0 0.0
    %200 = vmatprep.subr.mxu0 0.0
    %201 = vmatpush2.msra.mxu0 0.0
    %202 = vmatprep.subr.mxu0 0.0
    %203 = vmatpush2.msra.mxu0 0.0
    %204 = vmatprep.subr.mxu0 0.0
    %205 = vmatpush2.msra.mxu0 0.0
    %206 = vmatprep.subr.mxu0 0.0
    %207 = vmatpush2.msra.mxu0 0.0
    %208 = vmatprep.subr.mxu0 0.0
    %209 = vmatpush2.msra.mxu0 0.0
    %210 = vmatprep.subr.mxu0 0.0
    %211 = vmatpush2.msra.mxu0 0.0
    %212 = vmatprep.subr.mxu0 0.0
    %213 = vmatpush2.msra.mxu0 0.0
    %214 = vmatprep.subr.mxu0 0.0
    %215 = vmatpush2.msra.mxu0 0.0
    %216 = vmatprep.mubr.f32.mxu0 0.0
    %217 = vmatmul.mubr.f32.gmra.mxu0 %v79
    %v218 = vpop.f32.mrf.mxu0
    %v219 = vadd.f32 %v68, %v218
    %v220 = vpop.f32.mrf.mxu0
    %v221 = vadd.f32 %v72, %v220
    %222 = vdwg.mxu0
    %223 = vst [vmem:[#allocation2] sm:$0xff] %v148
    %224 = vst [vmem:[#allocation2 + $0x8] sm:$0xff] %v150
    %225 = vst [vmem:[#allocation2 + $0x10] sm:$0xff] %v219
    %226 = vst [vmem:[#allocation2 + $0x18] sm:$0xff] %v221
    %v227 = vld [vmem:[#allocation2] ss:$8 sm:$0xf]
    %v228 = vld [vmem:[#allocation4] sm:$0xff]
    %v229 = vld [vmem:[#allocation4 + $0x8] sm:$0xff]
    %v230 = vld [vmem:[#allocation4 + $0x10] sm:$0xff]
    %v231 = vld [vmem:[#allocation4 + $0x18] sm:$0xff]
    %v232 = vld [vmem:[#allocation4 + $0x20] sm:$0xff]
    %v233 = vld [vmem:[#allocation4 + $0x28] sm:$0xff]
    %v234 = vld [vmem:[#allocation4 + $0x30] sm:$0xff]
    %v235 = vld [vmem:[#allocation4 + $0x38] sm:$0xff]
    %v236 = vld [vmem:[#allocation4 + $0x40] sm:$0xff]
    %v237 = vld [vmem:[#allocation4 + $0x48] sm:$0xff]
    %v238 = vld [vmem:[#allocation4 + $0x50] sm:$0xff]
    %v239 = vld [vmem:[#allocation4 + $0x58] sm:$0xff]
    %v240 = vld [vmem:[#allocation4 + $0x60] sm:$0xff]
    %v241 = vld [vmem:[#allocation4 + $0x68] sm:$0xff]
    %v242 = vld [vmem:[#allocation4 + $0x70] sm:$0xff]
    %v243 = vld [vmem:[#allocation4 + $0x78] sm:$0xff]
    %v244 = vld [vmem:[#allocation4 + $0x80] sm:$0xff]
    %v245 = vld [vmem:[#allocation4 + $0x88] sm:$0xff]
    %v246 = vld [vmem:[#allocation4 + $0x90] sm:$0xff]
    %v247 = vld [vmem:[#allocation4 + $0x98] sm:$0xff]
    %v248 = vld [vmem:[#allocation4 + $0xa0] sm:$0xff]
    %v249 = vld [vmem:[#allocation4 + $0xa8] sm:$0xff]
    %v250 = vld [vmem:[#allocation4 + $0xb0] sm:$0xff]
    %v251 = vld [vmem:[#allocation4 + $0xb8] sm:$0xff]
    %v252 = vld [vmem:[#allocation4 + $0xc0] sm:$0xff]
    %v253 = vld [vmem:[#allocation4 + $0xc8] sm:$0xff]
    %v254 = vld [vmem:[#allocation4 + $0xd0] sm:$0xff]
    %v255 = vld [vmem:[#allocation4 + $0xd8] sm:$0xff]
    %v256 = vld [vmem:[#allocation4 + $0xe0] sm:$0xff]
    %v257 = vld [vmem:[#allocation4 + $0xe8] sm:$0xff]
    %v258 = vld [vmem:[#allocation4 + $0xf0] sm:$0xff]
    %v259 = vld [vmem:[#allocation4 + $0xf8] sm:$0xff]
    %v260 = vld [vmem:[#allocation4 + $0x100] sm:$0xff]
    %v261 = vld [vmem:[#allocation4 + $0x108] sm:$0xff]
    %v262 = vld [vmem:[#allocation4 + $0x110] sm:$0xff]
    %v263 = vld [vmem:[#allocation4 + $0x118] sm:$0xff]
    %v264 = vld [vmem:[#allocation4 + $0x120] sm:$0xff]
    %v265 = vld [vmem:[#allocation4 + $0x128] sm:$0xff]
    %v266 = vld [vmem:[#allocation4 + $0x130] sm:$0xff]
    %v267 = vld [vmem:[#allocation4 + $0x138] sm:$0xff]
    %v268 = vld [vmem:[#allocation4 + $0x140] sm:$0xff]
    %v269 = vld [vmem:[#allocation4 + $0x148] sm:$0xff]
    %v270 = vld [vmem:[#allocation4 + $0x150] sm:$0xff]
    %v271 = vld [vmem:[#allocation4 + $0x158] sm:$0xff]
    %v272 = vld [vmem:[#allocation4 + $0x160] sm:$0xff]
    %v273 = vld [vmem:[#allocation4 + $0x168] sm:$0xff]
    %v274 = vld [vmem:[#allocation4 + $0x170] sm:$0xff]
    %v275 = vld [vmem:[#allocation4 + $0x178] sm:$0xff]
    %v276 = vld [vmem:[#allocation4 + $0x180] sm:$0xff]
    %v277 = vld [vmem:[#allocation4 + $0x188] sm:$0xff]
    %v278 = vld [vmem:[#allocation4 + $0x190] sm:$0xff]
    %v279 = vld [vmem:[#allocation4 + $0x198] sm:$0xff]
    %v280 = vld [vmem:[#allocation4 + $0x1a0] sm:$0xff]
    %v281 = vld [vmem:[#allocation4 + $0x1a8] sm:$0xff]
    %v282 = vld [vmem:[#allocation4 + $0x1b0] sm:$0xff]
    %v283 = vld [vmem:[#allocation4 + $0x1b8] sm:$0xff]
    %v284 = vld [vmem:[#allocation4 + $0x1c0] sm:$0xff]
    %v285 = vld [vmem:[#allocation4 + $0x1c8] sm:$0xff]
    %v286 = vld [vmem:[#allocation4 + $0x1d0] sm:$0xff]
    %v287 = vld [vmem:[#allocation4 + $0x1d8] sm:$0xff]
    %v288 = vld [vmem:[#allocation4 + $0x1e0] sm:$0xff]
    %v289 = vld [vmem:[#allocation4 + $0x1e8] sm:$0xff]
    %v290 = vld [vmem:[#allocation4 + $0x1f0] sm:$0xff]
    %v291 = vld [vmem:[#allocation4 + $0x1f8] sm:$0xff]
    %292 = vmatprep.subr.mxu0 %v289
    %293 = vmatpush1.msra.mxu0 %v288
    %294 = vmatprep.subr.mxu0 %v285
    %295 = vmatpush1.msra.mxu0 %v284
    %296 = vmatprep.subr.mxu0 %v281
    %297 = vmatpush1.msra.mxu0 %v280
    %298 = vmatprep.subr.mxu0 %v277
    %299 = vmatpush1.msra.mxu0 %v276
    %300 = vmatprep.subr.mxu0 %v273
    %301 = vmatpush1.msra.mxu0 %v272
    %302 = vmatprep.subr.mxu0 %v269
    %303 = vmatpush1.msra.mxu0 %v268
    %304 = vmatprep.subr.mxu0 %v265
    %305 = vmatpush1.msra.mxu0 %v264
    %306 = vmatprep.subr.mxu0 %v261
    %307 = vmatpush1.msra.mxu0 %v260
    %308 = vmatprep.subr.mxu0 %v257
    %309 = vmatpush1.msra.mxu0 %v256
    %310 = vmatprep.subr.mxu0 %v253
    %311 = vmatpush1.msra.mxu0 %v252
    %312 = vmatprep.subr.mxu0 %v249
    %313 = vmatpush1.msra.mxu0 %v248
    %314 = vmatprep.subr.mxu0 %v245
    %315 = vmatpush1.msra.mxu0 %v244
    %316 = vmatprep.subr.mxu0 %v241
    %317 = vmatpush1.msra.mxu0 %v240
    %318 = vmatprep.subr.mxu0 %v237
    %319 = vmatpush1.msra.mxu0 %v236
    %320 = vmatprep.subr.mxu0 %v233
    %321 = vmatpush1.msra.mxu0 %v232
    %322 = vmatprep.subr.mxu0 %v229
    %323 = vmatpush1.msra.mxu0 %v228
    %324 = vmatprep.subr.mxu0 0.0
    %325 = vmatpush2.msra.mxu0 0.0
    %326 = vmatprep.subr.mxu0 0.0
    %327 = vmatpush2.msra.mxu0 0.0
    %328 = vmatprep.subr.mxu0 0.0
    %329 = vmatpush2.msra.mxu0 0.0
    %330 = vmatprep.subr.mxu0 0.0
    %331 = vmatpush2.msra.mxu0 0.0
    %332 = vmatprep.subr.mxu0 0.0
    %333 = vmatpush2.msra.mxu0 0.0
    %334 = vmatprep.subr.mxu0 0.0
    %335 = vmatpush2.msra.mxu0 0.0
    %336 = vmatprep.subr.mxu0 0.0
    %337 = vmatpush2.msra.mxu0 0.0
    %338 = vmatprep.subr.mxu0 0.0
    %339 = vmatpush2.msra.mxu0 0.0
    %340 = vmatprep.subr.mxu0 0.0
    %341 = vmatpush2.msra.mxu0 0.0
    %342 = vmatprep.subr.mxu0 0.0
    %343 = vmatpush2.msra.mxu0 0.0
    %344 = vmatprep.subr.mxu0 0.0
    %345 = vmatpush2.msra.mxu0 0.0
    %346 = vmatprep.subr.mxu0 0.0
    %347 = vmatpush2.msra.mxu0 0.0
    %348 = vmatprep.subr.mxu0 0.0
    %349 = vmatpush2.msra.mxu0 0.0
    %350 = vmatprep.subr.mxu0 0.0
    %351 = vmatpush2.msra.mxu0 0.0
    %352 = vmatprep.subr.mxu0 0.0
    %353 = vmatpush2.msra.mxu0 0.0
    %354 = vmatprep.subr.mxu0 0.0
    %355 = vmatpush2.msra.mxu0 0.0
    %356 = vmatprep.mubr.f32.mxu0 0.0
    %357 = vmatmul.mubr.f32.gmra.mxu0 0.0
    %v358 = vpop.f32.mrf.mxu0
    %v359 = vadd.f32 0.0, %v358
    %v360 = vpop.f32.mrf.mxu0
    %v361 = vadd.f32 0.0, %v360
    %362 = vdwg.mxu0
    %363 = vmatprep.subr.mxu0 %v291
    %364 = vmatpush1.msra.mxu0 %v290
    %365 = vmatprep.subr.mxu0 %v287
    %366 = vmatpush1.msra.mxu0 %v286
    %367 = vmatprep.subr.mxu0 %v283
    %368 = vmatpush1.msra.mxu0 %v282
    %369 = vmatprep.subr.mxu0 %v279
    %370 = vmatpush1.msra.mxu0 %v278
    %371 = vmatprep.subr.mxu0 %v275
    %372 = vmatpush1.msra.mxu0 %v274
    %373 = vmatprep.subr.mxu0 %v271
    %374 = vmatpush1.msra.mxu0 %v270
    %375 = vmatprep.subr.mxu0 %v267
    %376 = vmatpush1.msra.mxu0 %v266
    %377 = vmatprep.subr.mxu0 %v263
    %378 = vmatpush1.msra.mxu0 %v262
    %379 = vmatprep.subr.mxu0 %v259
    %380 = vmatpush1.msra.mxu0 %v258
    %381 = vmatprep.subr.mxu0 %v255
    %382 = vmatpush1.msra.mxu0 %v254
    %383 = vmatprep.subr.mxu0 %v251
    %384 = vmatpush1.msra.mxu0 %v250
    %385 = vmatprep.subr.mxu0 %v247
    %386 = vmatpush1.msra.mxu0 %v246
    %387 = vmatprep.subr.mxu0 %v243
    %388 = vmatpush1.msra.mxu0 %v242
    %389 = vmatprep.subr.mxu0 %v239
    %390 = vmatpush1.msra.mxu0 %v238
    %391 = vmatprep.subr.mxu0 %v235
    %392 = vmatpush1.msra.mxu0 %v234
    %393 = vmatprep.subr.mxu0 %v231
    %394 = vmatpush1.msra.mxu0 %v230
    %395 = vmatprep.subr.mxu0 0.0
    %396 = vmatpush2.msra.mxu0 0.0
    %397 = vmatprep.subr.mxu0 0.0
    %398 = vmatpush2.msra.mxu0 0.0
    %399 = vmatprep.subr.mxu0 0.0
    %400 = vmatpush2.msra.mxu0 0.0
    %401 = vmatprep.subr.mxu0 0.0
    %402 = vmatpush2.msra.mxu0 0.0
    %403 = vmatprep.subr.mxu0 0.0
    %404 = vmatpush2.msra.mxu0 0.0
    %405 = vmatprep.subr.mxu0 0.0
    %406 = vmatpush2.msra.mxu0 0.0
    %407 = vmatprep.subr.mxu0 0.0
    %408 = vmatpush2.msra.mxu0 0.0
    %409 = vmatprep.subr.mxu0 0.0
    %410 = vmatpush2.msra.mxu0 0.0
    %411 = vmatprep.subr.mxu0 0.0
    %412 = vmatpush2.msra.mxu0 0.0
    %413 = vmatprep.subr.mxu0 0.0
    %414 = vmatpush2.msra.mxu0 0.0
    %415 = vmatprep.subr.mxu0 0.0
    %416 = vmatpush2.msra.mxu0 0.0
    %417 = vmatprep.subr.mxu0 0.0
    %418 = vmatpush2.msra.mxu0 0.0
    %419 = vmatprep.subr.mxu0 0.0
    %420 = vmatpush2.msra.mxu0 0.0
    %421 = vmatprep.subr.mxu0 0.0
    %422 = vmatpush2.msra.mxu0 0.0
    %423 = vmatprep.subr.mxu0 0.0
    %424 = vmatpush2.msra.mxu0 0.0
    %425 = vmatprep.subr.mxu0 0.0
    %426 = vmatpush2.msra.mxu0 0.0
    %427 = vmatprep.mubr.f32.mxu0 0.0
    %428 = vmatmul.mubr.f32.gmra.mxu0 0.0
    %v429 = vpop.f32.mrf.mxu0
    %v430 = vadd.f32 0.0, %v429
    %v431 = vpop.f32.mrf.mxu0
    %v432 = vadd.f32 0.0, %v431
    %433 = vdwg.mxu0
    %v438 = vcombine.low %v359, %v361
    %v439 = vcombine.low %v430, %v432
    %v441 = vunpack.c.l.s4 1966171168
    %v442 = vunpack.c.0.s8 %v441
    %v443 = vlaneseq
    %v444 = vshrl.u32 %v443, 7
    %v445 = vsub.s32 %v442, %v444
    %v446 = vrot.slane %v438, %v445
    %v448 = vunpack.c.l.s4 1966171168
    %v449 = vunpack.c.0.s8 %v448
    %v450 = vlaneseq
    %v451 = vshrl.u32 %v450, 7
    %v452 = vsub.s32 %v449, %v451
    %v453 = vrot.slane %v439, %v452
    %v454 = vcombine.low %v446, %v453
    %v456 = vunpack.c.l.s4 1966171168
    %v457 = vunpack.c.0.s8 %v456
    %v458 = vlaneseq
    %v459 = vshrl.u32 %v458, 7
    %v460 = vsub.s32 %v457, %v459
    %v461 = vrot.slane %v454, %v460
    %v463 = vadd.f32 %v227, %v461
    %v464 = vtanh.pop %v463
    %v465 = vmul.f32 %v464, 0.5
    %v466 = vadd.f32 %v465, 0.5
    %v468 = vrot.slane %v464, 1
    %v470 = vmul.f32 %v468, 0.5
    %v471 = vadd.f32 %v470, 0.5
    %v472 = vrot.slane %v464, 3
    %v474 = vmul.f32 %v472, 0.5
    %v475 = vadd.f32 %v474, 0.5
    %v476 = vmul.f32 %v471, 0.0
    %v477 = vrot.slane %v464, 2
    %v479 = vmul.f32 %v466, %v477
    %v480 = vadd.f32 %v476, %v479
    %v481 = vtanh.pop %v480
    %v482 = vmul.f32 %v475, %v481
    %483 = vst [vmem:[#allocation3] sm:$0x1] %v482
    %s484 = scalar_lea.vmem [#allocation2], 1
    %v485 = vld [vmem:[%s484] ss:$8 sm:$0xf]
    %v486 = vld [vmem:[#allocation4] sm:$0xff]
    %v487 = vld [vmem:[#allocation4 + $0x8] sm:$0xff]
    %v488 = vld [vmem:[#allocation4 + $0x10] sm:$0xff]
    %v489 = vld [vmem:[#allocation4 + $0x18] sm:$0xff]
    %v490 = vld [vmem:[#allocation4 + $0x20] sm:$0xff]
    %v491 = vld [vmem:[#allocation4 + $0x28] sm:$0xff]
    %v492 = vld [vmem:[#allocation4 + $0x30] sm:$0xff]
    %v493 = vld [vmem:[#allocation4 + $0x38] sm:$0xff]
    %v494 = vld [vmem:[#allocation4 + $0x40] sm:$0xff]
    %v495 = vld [vmem:[#allocation4 + $0x48] sm:$0xff]
    %v496 = vld [vmem:[#allocation4 + $0x50] sm:$0xff]
    %v497 = vld [vmem:[#allocation4 + $0x58] sm:$0xff]
    %v498 = vld [vmem:[#allocation4 + $0x60] sm:$0xff]
    %v499 = vld [vmem:[#allocation4 + $0x68] sm:$0xff]
    %v500 = vld [vmem:[#allocation4 + $0x70] sm:$0xff]
    %v501 = vld [vmem:[#allocation4 + $0x78] sm:$0xff]
    %v502 = vld [vmem:[#allocation4 + $0x80] sm:$0xff]
    %v503 = vld [vmem:[#allocation4 + $0x88] sm:$0xff]
    %v504 = vld [vmem:[#allocation4 + $0x90] sm:$0xff]
    %v505 = vld [vmem:[#allocation4 + $0x98] sm:$0xff]
    %v506 = vld [vmem:[#allocation4 + $0xa0] sm:$0xff]
    %v507 = vld [vmem:[#allocation4 + $0xa8] sm:$0xff]
    %v508 = vld [vmem:[#allocation4 + $0xb0] sm:$0xff]
    %v509 = vld [vmem:[#allocation4 + $0xb8] sm:$0xff]
    %v510 = vld [vmem:[#allocation4 + $0xc0] sm:$0xff]
    %v511 = vld [vmem:[#allocation4 + $0xc8] sm:$0xff]
    %v512 = vld [vmem:[#allocation4 + $0xd0] sm:$0xff]
    %v513 = vld [vmem:[#allocation4 + $0xd8] sm:$0xff]
    %v514 = vld [vmem:[#allocation4 + $0xe0] sm:$0xff]
    %v515 = vld [vmem:[#allocation4 + $0xe8] sm:$0xff]
    %v516 = vld [vmem:[#allocation4 + $0xf0] sm:$0xff]
    %v517 = vld [vmem:[#allocation4 + $0xf8] sm:$0xff]
    %v518 = vld [vmem:[#allocation4 + $0x100] sm:$0xff]
    %v519 = vld [vmem:[#allocation4 + $0x108] sm:$0xff]
    %v520 = vld [vmem:[#allocation4 + $0x110] sm:$0xff]
    %v521 = vld [vmem:[#allocation4 + $0x118] sm:$0xff]
    %v522 = vld [vmem:[#allocation4 + $0x120] sm:$0xff]
    %v523 = vld [vmem:[#allocation4 + $0x128] sm:$0xff]
    %v524 = vld [vmem:[#allocation4 + $0x130] sm:$0xff]
    %v525 = vld [vmem:[#allocation4 + $0x138] sm:$0xff]
    %v526 = vld [vmem:[#allocation4 + $0x140] sm:$0xff]
    %v527 = vld [vmem:[#allocation4 + $0x148] sm:$0xff]
    %v528 = vld [vmem:[#allocation4 + $0x150] sm:$0xff]
    %v529 = vld [vmem:[#allocation4 + $0x158] sm:$0xff]
    %v530 = vld [vmem:[#allocation4 + $0x160] sm:$0xff]
    %v531 = vld [vmem:[#allocation4 + $0x168] sm:$0xff]
    %v532 = vld [vmem:[#allocation4 + $0x170] sm:$0xff]
    %v533 = vld [vmem:[#allocation4 + $0x178] sm:$0xff]
    %v534 = vld [vmem:[#allocation4 + $0x180] sm:$0xff]
    %v535 = vld [vmem:[#allocation4 + $0x188] sm:$0xff]
    %v536 = vld [vmem:[#allocation4 + $0x190] sm:$0xff]
    %v537 = vld [vmem:[#allocation4 + $0x198] sm:$0xff]
    %v538 = vld [vmem:[#allocation4 + $0x1a0] sm:$0xff]
    %v539 = vld [vmem:[#allocation4 + $0x1a8] sm:$0xff]
    %v540 = vld [vmem:[#allocation4 + $0x1b0] sm:$0xff]
    %v541 = vld [vmem:[#allocation4 + $0x1b8] sm:$0xff]
    %v542 = vld [vmem:[#allocation4 + $0x1c0] sm:$0xff]
    %v543 = vld [vmem:[#allocation4 + $0x1c8] sm:$0xff]
    %v544 = vld [vmem:[#allocation4 + $0x1d0] sm:$0xff]
    %v545 = vld [vmem:[#allocation4 + $0x1d8] sm:$0xff]
    %v546 = vld [vmem:[#allocation4 + $0x1e0] sm:$0xff]
    %v547 = vld [vmem:[#allocation4 + $0x1e8] sm:$0xff]
    %v548 = vld [vmem:[#allocation4 + $0x1f0] sm:$0xff]
    %v549 = vld [vmem:[#allocation4 + $0x1f8] sm:$0xff]
    %550 = vmatprep.subr.mxu0 %v547
    %551 = vmatpush1.msra.mxu0 %v546
    %552 = vmatprep.subr.mxu0 %v543
    %553 = vmatpush1.msra.mxu0 %v542
    %554 = vmatprep.subr.mxu0 %v539
    %555 = vmatpush1.msra.mxu0 %v538
    %556 = vmatprep.subr.mxu0 %v535
    %557 = vmatpush1.msra.mxu0 %v534
    %558 = vmatprep.subr.mxu0 %v531
    %559 = vmatpush1.msra.mxu0 %v530
    %560 = vmatprep.subr.mxu0 %v527
    %561 = vmatpush1.msra.mxu0 %v526
    %562 = vmatprep.subr.mxu0 %v523
    %563 = vmatpush1.msra.mxu0 %v522
    %564 = vmatprep.subr.mxu0 %v519
    %565 = vmatpush1.msra.mxu0 %v518
    %566 = vmatprep.subr.mxu0 %v515
    %567 = vmatpush1.msra.mxu0 %v514
    %568 = vmatprep.subr.mxu0 %v511
    %569 = vmatpush1.msra.mxu0 %v510
    %570 = vmatprep.subr.mxu0 %v507
    %571 = vmatpush1.msra.mxu0 %v506
    %572 = vmatprep.subr.mxu0 %v503
    %573 = vmatpush1.msra.mxu0 %v502
    %574 = vmatprep.subr.mxu0 %v499
    %575 = vmatpush1.msra.mxu0 %v498
    %576 = vmatprep.subr.mxu0 %v495
    %577 = vmatpush1.msra.mxu0 %v494
    %578 = vmatprep.subr.mxu0 %v491
    %579 = vmatpush1.msra.mxu0 %v490
    %580 = vmatprep.subr.mxu0 %v487
    %581 = vmatpush1.msra.mxu0 %v486
    %582 = vmatprep.subr.mxu0 0.0
    %583 = vmatpush2.msra.mxu0 0.0
    %584 = vmatprep.subr.mxu0 0.0
    %585 = vmatpush2.msra.mxu0 0.0
    %586 = vmatprep.subr.mxu0 0.0
    %587 = vmatpush2.msra.mxu0 0.0
    %588 = vmatprep.subr.mxu0 0.0
    %589 = vmatpush2.msra.mxu0 0.0
    %590 = vmatprep.subr.mxu0 0.0
    %591 = vmatpush2.msra.mxu0 0.0
    %592 = vmatprep.subr.mxu0 0.0
    %593 = vmatpush2.msra.mxu0 0.0
    %594 = vmatprep.subr.mxu0 0.0
    %595 = vmatpush2.msra.mxu0 0.0
    %596 = vmatprep.subr.mxu0 0.0
    %597 = vmatpush2.msra.mxu0 0.0
    %598 = vmatprep.subr.mxu0 0.0
    %599 = vmatpush2.msra.mxu0 0.0
    %600 = vmatprep.subr.mxu0 0.0
    %601 = vmatpush2.msra.mxu0 0.0
    %602 = vmatprep.subr.mxu0 0.0
    %603 = vmatpush2.msra.mxu0 0.0
    %604 = vmatprep.subr.mxu0 0.0
    %605 = vmatpush2.msra.mxu0 0.0
    %606 = vmatprep.subr.mxu0 0.0
    %607 = vmatpush2.msra.mxu0 0.0
    %608 = vmatprep.subr.mxu0 0.0
    %609 = vmatpush2.msra.mxu0 0.0
    %610 = vmatprep.subr.mxu0 0.0
    %611 = vmatpush2.msra.mxu0 0.0
    %612 = vmatprep.subr.mxu0 0.0
    %613 = vmatpush2.msra.mxu0 0.0
    %614 = vmatprep.mubr.f32.mxu0 0.0
    %615 = vmatmul.mubr.f32.gmra.mxu0 %v482
    %v616 = vpop.f32.mrf.mxu0
    %v617 = vadd.f32 0.0, %v616
    %v618 = vpop.f32.mrf.mxu0
    %v619 = vadd.f32 0.0, %v618
    %620 = vdwg.mxu0
    %621 = vmatprep.subr.mxu0 %v549
    %622 = vmatpush1.msra.mxu0 %v548
    %623 = vmatprep.subr.mxu0 %v545
    %624 = vmatpush1.msra.mxu0 %v544
    %625 = vmatprep.subr.mxu0 %v541
    %626 = vmatpush1.msra.mxu0 %v540
    %627 = vmatprep.subr.mxu0 %v537
    %628 = vmatpush1.msra.mxu0 %v536
    %629 = vmatprep.subr.mxu0 %v533
    %630 = vmatpush1.msra.mxu0 %v532
    %631 = vmatprep.subr.mxu0 %v529
    %632 = vmatpush1.msra.mxu0 %v528
    %633 = vmatprep.subr.mxu0 %v525
    %634 = vmatpush1.msra.mxu0 %v524
    %635 = vmatprep.subr.mxu0 %v521
    %636 = vmatpush1.msra.mxu0 %v520
    %637 = vmatprep.subr.mxu0 %v517
    %638 = vmatpush1.msra.mxu0 %v516
    %639 = vmatprep.subr.mxu0 %v513
    %640 = vmatpush1.msra.mxu0 %v512
    %641 = vmatprep.subr.mxu0 %v509
    %642 = vmatpush1.msra.mxu0 %v508
    %643 = vmatprep.subr.mxu0 %v505
    %644 = vmatpush1.msra.mxu0 %v504
    %645 = vmatprep.subr.mxu0 %v501
    %646 = vmatpush1.msra.mxu0 %v500
    %647 = vmatprep.subr.mxu0 %v497
    %648 = vmatpush1.msra.mxu0 %v496
    %649 = vmatprep.subr.mxu0 %v493
    %650 = vmatpush1.msra.mxu0 %v492
    %651 = vmatprep.subr.mxu0 %v489
    %652 = vmatpush1.msra.mxu0 %v488
    %653 = vmatprep.subr.mxu0 0.0
    %654 = vmatpush2.msra.mxu0 0.0
    %655 = vmatprep.subr.mxu0 0.0
    %656 = vmatpush2.msra.mxu0 0.0
    %657 = vmatprep.subr.mxu0 0.0
    %658 = vmatpush2.msra.mxu0 0.0
    %659 = vmatprep.subr.mxu0 0.0
    %660 = vmatpush2.msra.mxu0 0.0
    %661 = vmatprep.subr.mxu0 0.0
    %662 = vmatpush2.msra.mxu0 0.0
    %663 = vmatprep.subr.mxu0 0.0
    %664 = vmatpush2.msra.mxu0 0.0
    %665 = vmatprep.subr.mxu0 0.0
    %666 = vmatpush2.msra.mxu0 0.0
    %667 = vmatprep.subr.mxu0 0.0
    %668 = vmatpush2.msra.mxu0 0.0
    %669 = vmatprep.subr.mxu0 0.0
    %670 = vmatpush2.msra.mxu0 0.0
    %671 = vmatprep.subr.mxu0 0.0
    %672 = vmatpush2.msra.mxu0 0.0
    %673 = vmatprep.subr.mxu0 0.0
    %674 = vmatpush2.msra.mxu0 0.0
    %675 = vmatprep.subr.mxu0 0.0
    %676 = vmatpush2.msra.mxu0 0.0
    %677 = vmatprep.subr.mxu0 0.0
    %678 = vmatpush2.msra.mxu0 0.0
    %679 = vmatprep.subr.mxu0 0.0
    %680 = vmatpush2.msra.mxu0 0.0
    %681 = vmatprep.subr.mxu0 0.0
    %682 = vmatpush2.msra.mxu0 0.0
    %683 = vmatprep.subr.mxu0 0.0
    %684 = vmatpush2.msra.mxu0 0.0
    %685 = vmatprep.mubr.f32.mxu0 0.0
    %686 = vmatmul.mubr.f32.gmra.mxu0 %v482
    %v687 = vpop.f32.mrf.mxu0
    %v688 = vadd.f32 0.0, %v687
    %v689 = vpop.f32.mrf.mxu0
    %v690 = vadd.f32 0.0, %v689
    %691 = vdwg.mxu0
    %v696 = vcombine.low %v617, %v619
    %v697 = vcombine.low %v688, %v690
    %v699 = vunpack.c.l.s4 1966171168
    %v700 = vunpack.c.0.s8 %v699
    %v701 = vlaneseq
    %v702 = vshrl.u32 %v701, 7
    %v703 = vsub.s32 %v700, %v702
    %v704 = vrot.slane %v696, %v703
    %v706 = vunpack.c.l.s4 1966171168
    %v707 = vunpack.c.0.s8 %v706
    %v708 = vlaneseq
    %v709 = vshrl.u32 %v708, 7
    %v710 = vsub.s32 %v707, %v709
    %v711 = vrot.slane %v697, %v710
    %v712 = vcombine.low %v704, %v711
    %v714 = vunpack.c.l.s4 1966171168
    %v715 = vunpack.c.0.s8 %v714
    %v716 = vlaneseq
    %v717 = vshrl.u32 %v716, 7
    %v718 = vsub.s32 %v715, %v717
    %v719 = vrot.slane %v712, %v718
    %v721 = vadd.f32 %v485, %v719
    %v722 = vtanh.pop %v721
    %v723 = vmul.f32 %v722, 0.5
    %v724 = vadd.f32 %v723, 0.5
    %v726 = vrot.slane %v722, 1
    %v728 = vmul.f32 %v726, 0.5
    %v729 = vadd.f32 %v728, 0.5
    %v730 = vrot.slane %v722, 3
    %v732 = vmul.f32 %v730, 0.5
    %v733 = vadd.f32 %v732, 0.5
    %v734 = vmul.f32 %v729, %v480
    %v735 = vrot.slane %v722, 2
    %v737 = vmul.f32 %v724, %v735
    %v738 = vadd.f32 %v734, %v737
    %v739 = vtanh.pop %v738
    %v740 = vmul.f32 %v733, %v739
    %741 = vst [vmem:[#allocation3 + $0x1] sm:$0x1] %v740
    %s742 = scalar_lea.vmem [#allocation2], 2
    %v743 = vld [vmem:[%s742] ss:$8 sm:$0xf]
    %v744 = vld [vmem:[#allocation4] sm:$0xff]
    %v745 = vld [vmem:[#allocation4 + $0x8] sm:$0xff]
    %v746 = vld [vmem:[#allocation4 + $0x10] sm:$0xff]
    %v747 = vld [vmem:[#allocation4 + $0x18] sm:$0xff]
    %v748 = vld [vmem:[#allocation4 + $0x20] sm:$0xff]
    %v749 = vld [vmem:[#allocation4 + $0x28] sm:$0xff]
    %v750 = vld [vmem:[#allocation4 + $0x30] sm:$0xff]
    %v751 = vld [vmem:[#allocation4 + $0x38] sm:$0xff]
    %v752 = vld [vmem:[#allocation4 + $0x40] sm:$0xff]
    %v753 = vld [vmem:[#allocation4 + $0x48] sm:$0xff]
    %v754 = vld [vmem:[#allocation4 + $0x50] sm:$0xff]
    %v755 = vld [vmem:[#allocation4 + $0x58] sm:$0xff]
    %v756 = vld [vmem:[#allocation4 + $0x60] sm:$0xff]
    %v757 = vld [vmem:[#allocation4 + $0x68] sm:$0xff]
    %v758 = vld [vmem:[#allocation4 + $0x70] sm:$0xff]
    %v759 = vld [vmem:[#allocation4 + $0x78] sm:$0xff]
    %v760 = vld [vmem:[#allocation4 + $0x80] sm:$0xff]
    %v761 = vld [vmem:[#allocation4 + $0x88] sm:$0xff]
    %v762 = vld [vmem:[#allocation4 + $0x90] sm:$0xff]
    %v763 = vld [vmem:[#allocation4 + $0x98] sm:$0xff]
    %v764 = vld [vmem:[#allocation4 + $0xa0] sm:$0xff]
    %v765 = vld [vmem:[#allocation4 + $0xa8] sm:$0xff]
    %v766 = vld [vmem:[#allocation4 + $0xb0] sm:$0xff]
    %v767 = vld [vmem:[#allocation4 + $0xb8] sm:$0xff]
    %v768 = vld [vmem:[#allocation4 + $0xc0] sm:$0xff]
    %v769 = vld [vmem:[#allocation4 + $0xc8] sm:$0xff]
    %v770 = vld [vmem:[#allocation4 + $0xd0] sm:$0xff]
    %v771 = vld [vmem:[#allocation4 + $0xd8] sm:$0xff]
    %v772 = vld [vmem:[#allocation4 + $0xe0] sm:$0xff]
    %v773 = vld [vmem:[#allocation4 + $0xe8] sm:$0xff]
    %v774 = vld [vmem:[#allocation4 + $0xf0] sm:$0xff]
    %v775 = vld [vmem:[#allocation4 + $0xf8] sm:$0xff]
    %v776 = vld [vmem:[#allocation4 + $0x100] sm:$0xff]
    %v777 = vld [vmem:[#allocation4 + $0x108] sm:$0xff]
    %v778 = vld [vmem:[#allocation4 + $0x110] sm:$0xff]
    %v779 = vld [vmem:[#allocation4 + $0x118] sm:$0xff]
    %v780 = vld [vmem:[#allocation4 + $0x120] sm:$0xff]
    %v781 = vld [vmem:[#allocation4 + $0x128] sm:$0xff]
    %v782 = vld [vmem:[#allocation4 + $0x130] sm:$0xff]
    %v783 = vld [vmem:[#allocation4 + $0x138] sm:$0xff]
    %v784 = vld [vmem:[#allocation4 + $0x140] sm:$0xff]
    %v785 = vld [vmem:[#allocation4 + $0x148] sm:$0xff]
    %v786 = vld [vmem:[#allocation4 + $0x150] sm:$0xff]
    %v787 = vld [vmem:[#allocation4 + $0x158] sm:$0xff]
    %v788 = vld [vmem:[#allocation4 + $0x160] sm:$0xff]
    %v789 = vld [vmem:[#allocation4 + $0x168] sm:$0xff]
    %v790 = vld [vmem:[#allocation4 + $0x170] sm:$0xff]
    %v791 = vld [vmem:[#allocation4 + $0x178] sm:$0xff]
    %v792 = vld [vmem:[#allocation4 + $0x180] sm:$0xff]
    %v793 = vld [vmem:[#allocation4 + $0x188] sm:$0xff]
    %v794 = vld [vmem:[#allocation4 + $0x190] sm:$0xff]
    %v795 = vld [vmem:[#allocation4 + $0x198] sm:$0xff]
    %v796 = vld [vmem:[#allocation4 + $0x1a0] sm:$0xff]
    %v797 = vld [vmem:[#allocation4 + $0x1a8] sm:$0xff]
    %v798 = vld [vmem:[#allocation4 + $0x1b0] sm:$0xff]
    %v799 = vld [vmem:[#allocation4 + $0x1b8] sm:$0xff]
    %v800 = vld [vmem:[#allocation4 + $0x1c0] sm:$0xff]
    %v801 = vld [vmem:[#allocation4 + $0x1c8] sm:$0xff]
    %v802 = vld [vmem:[#allocation4 + $0x1d0] sm:$0xff]
    %v803 = vld [vmem:[#allocation4 + $0x1d8] sm:$0xff]
    %v804 = vld [vmem:[#allocation4 + $0x1e0] sm:$0xff]
    %v805 = vld [vmem:[#allocation4 + $0x1e8] sm:$0xff]
    %v806 = vld [vmem:[#allocation4 + $0x1f0] sm:$0xff]
    %v807 = vld [vmem:[#allocation4 + $0x1f8] sm:$0xff]
    %808 = vmatprep.subr.mxu0 %v805
    %809 = vmatpush1.msra.mxu0 %v804
    %810 = vmatprep.subr.mxu0 %v801
    %811 = vmatpush1.msra.mxu0 %v800
    %812 = vmatprep.subr.mxu0 %v797
    %813 = vmatpush1.msra.mxu0 %v796
    %814 = vmatprep.subr.mxu0 %v793
    %815 = vmatpush1.msra.mxu0 %v792
    %816 = vmatprep.subr.mxu0 %v789
    %817 = vmatpush1.msra.mxu0 %v788
    %818 = vmatprep.subr.mxu0 %v785
    %819 = vmatpush1.msra.mxu0 %v784
    %820 = vmatprep.subr.mxu0 %v781
    %821 = vmatpush1.msra.mxu0 %v780
    %822 = vmatprep.subr.mxu0 %v777
    %823 = vmatpush1.msra.mxu0 %v776
    %824 = vmatprep.subr.mxu0 %v773
    %825 = vmatpush1.msra.mxu0 %v772
    %826 = vmatprep.subr.mxu0 %v769
    %827 = vmatpush1.msra.mxu0 %v768
    %828 = vmatprep.subr.mxu0 %v765
    %829 = vmatpush1.msra.mxu0 %v764
    %830 = vmatprep.subr.mxu0 %v761
    %831 = vmatpush1.msra.mxu0 %v760
    %832 = vmatprep.subr.mxu0 %v757
    %833 = vmatpush1.msra.mxu0 %v756
    %834 = vmatprep.subr.mxu0 %v753
    %835 = vmatpush1.msra.mxu0 %v752
    %836 = vmatprep.subr.mxu0 %v749
    %837 = vmatpush1.msra.mxu0 %v748
    %838 = vmatprep.subr.mxu0 %v745
    %839 = vmatpush1.msra.mxu0 %v744
    %840 = vmatprep.subr.mxu0 0.0
    %841 = vmatpush2.msra.mxu0 0.0
    %842 = vmatprep.subr.mxu0 0.0
    %843 = vmatpush2.msra.mxu0 0.0
    %844 = vmatprep.subr.mxu0 0.0
    %845 = vmatpush2.msra.mxu0 0.0
    %846 = vmatprep.subr.mxu0 0.0
    %847 = vmatpush2.msra.mxu0 0.0
    %848 = vmatprep.subr.mxu0 0.0
    %849 = vmatpush2.msra.mxu0 0.0
    %850 = vmatprep.subr.mxu0 0.0
    %851 = vmatpush2.msra.mxu0 0.0
    %852 = vmatprep.subr.mxu0 0.0
    %853 = vmatpush2.msra.mxu0 0.0
    %854 = vmatprep.subr.mxu0 0.0
    %855 = vmatpush2.msra.mxu0 0.0
    %856 = vmatprep.subr.mxu0 0.0
    %857 = vmatpush2.msra.mxu0 0.0
    %858 = vmatprep.subr.mxu0 0.0
    %859 = vmatpush2.msra.mxu0 0.0
    %860 = vmatprep.subr.mxu0 0.0
    %861 = vmatpush2.msra.mxu0 0.0
    %862 = vmatprep.subr.mxu0 0.0
    %863 = vmatpush2.msra.mxu0 0.0
    %864 = vmatprep.subr.mxu0 0.0
    %865 = vmatpush2.msra.mxu0 0.0
    %866 = vmatprep.subr.mxu0 0.0
    %867 = vmatpush2.msra.mxu0 0.0
    %868 = vmatprep.subr.mxu0 0.0
    %869 = vmatpush2.msra.mxu0 0.0
    %870 = vmatprep.subr.mxu0 0.0
    %871 = vmatpush2.msra.mxu0 0.0
    %872 = vmatprep.mubr.f32.mxu0 0.0
    %873 = vmatmul.mubr.f32.gmra.mxu0 %v740
    %v874 = vpop.f32.mrf.mxu0
    %v875 = vadd.f32 0.0, %v874
    %v876 = vpop.f32.mrf.mxu0
    %v877 = vadd.f32 0.0, %v876
    %878 = vdwg.mxu0
    %879 = vmatprep.subr.mxu0 %v807
    %880 = vmatpush1.msra.mxu0 %v806
    %881 = vmatprep.subr.mxu0 %v803
    %882 = vmatpush1.msra.mxu0 %v802
    %883 = vmatprep.subr.mxu0 %v799
    %884 = vmatpush1.msra.mxu0 %v798
    %885 = vmatprep.subr.mxu0 %v795
    %886 = vmatpush1.msra.mxu0 %v794
    %887 = vmatprep.subr.mxu0 %v791
    %888 = vmatpush1.msra.mxu0 %v790
    %889 = vmatprep.subr.mxu0 %v787
    %890 = vmatpush1.msra.mxu0 %v786
    %891 = vmatprep.subr.mxu0 %v783
    %892 = vmatpush1.msra.mxu0 %v782
    %893 = vmatprep.subr.mxu0 %v779
    %894 = vmatpush1.msra.mxu0 %v778
    %895 = vmatprep.subr.mxu0 %v775
    %896 = vmatpush1.msra.mxu0 %v774
    %897 = vmatprep.subr.mxu0 %v771
    %898 = vmatpush1.msra.mxu0 %v770
    %899 = vmatprep.subr.mxu0 %v767
    %900 = vmatpush1.msra.mxu0 %v766
    %901 = vmatprep.subr.mxu0 %v763
    %902 = vmatpush1.msra.mxu0 %v762
    %903 = vmatprep.subr.mxu0 %v759
    %904 = vmatpush1.msra.mxu0 %v758
    %905 = vmatprep.subr.mxu0 %v755
    %906 = vmatpush1.msra.mxu0 %v754
    %907 = vmatprep.subr.mxu0 %v751
    %908 = vmatpush1.msra.mxu0 %v750
    %909 = vmatprep.subr.mxu0 %v747
    %910 = vmatpush1.msra.mxu0 %v746
    %911 = vmatprep.subr.mxu0 0.0
    %912 = vmatpush2.msra.mxu0 0.0
    %913 = vmatprep.subr.mxu0 0.0
    %914 = vmatpush2.msra.mxu0 0.0
    %915 = vmatprep.subr.mxu0 0.0
    %916 = vmatpush2.msra.mxu0 0.0
    %917 = vmatprep.subr.mxu0 0.0
    %918 = vmatpush2.msra.mxu0 0.0
    %919 = vmatprep.subr.mxu0 0.0
    %920 = vmatpush2.msra.mxu0 0.0
    %921 = vmatprep.subr.mxu0 0.0
    %922 = vmatpush2.msra.mxu0 0.0
    %923 = vmatprep.subr.mxu0 0.0
    %924 = vmatpush2.msra.mxu0 0.0
    %925 = vmatprep.subr.mxu0 0.0
    %926 = vmatpush2.msra.mxu0 0.0
    %927 = vmatprep.subr.mxu0 0.0
    %928 = vmatpush2.msra.mxu0 0.0
    %929 = vmatprep.subr.mxu0 0.0
    %930 = vmatpush2.msra.mxu0 0.0
    %931 = vmatprep.subr.mxu0 0.0
    %932 = vmatpush2.msra.mxu0 0.0
    %933 = vmatprep.subr.mxu0 0.0
    %934 = vmatpush2.msra.mxu0 0.0
    %935 = vmatprep.subr.mxu0 0.0
    %936 = vmatpush2.msra.mxu0 0.0
    %937 = vmatprep.subr.mxu0 0.0
    %938 = vmatpush2.msra.mxu0 0.0
    %939 = vmatprep.subr.mxu0 0.0
    %940 = vmatpush2.msra.mxu0 0.0
    %941 = vmatprep.subr.mxu0 0.0
    %942 = vmatpush2.msra.mxu0 0.0
    %943 = vmatprep.mubr.f32.mxu0 0.0
    %944 = vmatmul.mubr.f32.gmra.mxu0 %v740
    %v945 = vpop.f32.mrf.mxu0
    %v946 = vadd.f32 0.0, %v945
    %v947 = vpop.f32.mrf.mxu0
    %v948 = vadd.f32 0.0, %v947
    %949 = vdwg.mxu0
    %v954 = vcombine.low %v875, %v877
    %v955 = vcombine.low %v946, %v948
    %v957 = vunpack.c.l.s4 1966171168
    %v958 = vunpack.c.0.s8 %v957
    %v959 = vlaneseq
    %v960 = vshrl.u32 %v959, 7
    %v961 = vsub.s32 %v958, %v960
    %v962 = vrot.slane %v954, %v961
    %v964 = vunpack.c.l.s4 1966171168
    %v965 = vunpack.c.0.s8 %v964
    %v966 = vlaneseq
    %v967 = vshrl.u32 %v966, 7
    %v968 = vsub.s32 %v965, %v967
    %v969 = vrot.slane %v955, %v968
    %v970 = vcombine.low %v962, %v969
    %v972 = vunpack.c.l.s4 1966171168
    %v973 = vunpack.c.0.s8 %v972
    %v974 = vlaneseq
    %v975 = vshrl.u32 %v974, 7
    %v976 = vsub.s32 %v973, %v975
    %v977 = vrot.slane %v970, %v976
    %v979 = vadd.f32 %v743, %v977
    %v980 = vtanh.pop %v979
    %v981 = vmul.f32 %v980, 0.5
    %v982 = vadd.f32 %v981, 0.5
    %v984 = vrot.slane %v980, 1
    %v986 = vmul.f32 %v984, 0.5
    %v987 = vadd.f32 %v986, 0.5
    %v988 = vrot.slane %v980, 3
    %v990 = vmul.f32 %v988, 0.5
    %v991 = vadd.f32 %v990, 0.5
    %v992 = vmul.f32 %v987, %v738
    %v993 = vrot.slane %v980, 2
    %v995 = vmul.f32 %v982, %v993
    %v996 = vadd.f32 %v992, %v995
    %v997 = vtanh.pop %v996
    %v998 = vmul.f32 %v991, %v997
    %999 = vst [vmem:[#allocation3 + $0x2] sm:$0x1] %v998
    %s1000 = scalar_lea.vmem [#allocation2], 3
    %v1001 = vld [vmem:[%s1000] ss:$8 sm:$0xf]
    %v1002 = vld [vmem:[#allocation4] sm:$0xff]
    %v1003 = vld [vmem:[#allocation4 + $0x8] sm:$0xff]
    %v1004 = vld [vmem:[#allocation4 + $0x10] sm:$0xff]
    %v1005 = vld [vmem:[#allocation4 + $0x18] sm:$0xff]
    %v1006 = vld [vmem:[#allocation4 + $0x20] sm:$0xff]
    %v1007 = vld [vmem:[#allocation4 + $0x28] sm:$0xff]
    %v1008 = vld [vmem:[#allocation4 + $0x30] sm:$0xff]
    %v1009 = vld [vmem:[#allocation4 + $0x38] sm:$0xff]
    %v1010 = vld [vmem:[#allocation4 + $0x40] sm:$0xff]
    %v1011 = vld [vmem:[#allocation4 + $0x48] sm:$0xff]
    %v1012 = vld [vmem:[#allocation4 + $0x50] sm:$0xff]
    %v1013 = vld [vmem:[#allocation4 + $0x58] sm:$0xff]
    %v1014 = vld [vmem:[#allocation4 + $0x60] sm:$0xff]
    %v1015 = vld [vmem:[#allocation4 + $0x68] sm:$0xff]
    %v1016 = vld [vmem:[#allocation4 + $0x70] sm:$0xff]
    %v1017 = vld [vmem:[#allocation4 + $0x78] sm:$0xff]
    %v1018 = vld [vmem:[#allocation4 + $0x80] sm:$0xff]
    %v1019 = vld [vmem:[#allocation4 + $0x88] sm:$0xff]
    %v1020 = vld [vmem:[#allocation4 + $0x90] sm:$0xff]
    %v1021 = vld [vmem:[#allocation4 + $0x98] sm:$0xff]
    %v1022 = vld [vmem:[#allocation4 + $0xa0] sm:$0xff]
    %v1023 = vld [vmem:[#allocation4 + $0xa8] sm:$0xff]
    %v1024 = vld [vmem:[#allocation4 + $0xb0] sm:$0xff]
    %v1025 = vld [vmem:[#allocation4 + $0xb8] sm:$0xff]
    %v1026 = vld [vmem:[#allocation4 + $0xc0] sm:$0xff]
    %v1027 = vld [vmem:[#allocation4 + $0xc8] sm:$0xff]
    %v1028 = vld [vmem:[#allocation4 + $0xd0] sm:$0xff]
    %v1029 = vld [vmem:[#allocation4 + $0xd8] sm:$0xff]
    %v1030 = vld [vmem:[#allocation4 + $0xe0] sm:$0xff]
    %v1031 = vld [vmem:[#allocation4 + $0xe8] sm:$0xff]
    %v1032 = vld [vmem:[#allocation4 + $0xf0] sm:$0xff]
    %v1033 = vld [vmem:[#allocation4 + $0xf8] sm:$0xff]
    %v1034 = vld [vmem:[#allocation4 + $0x100] sm:$0xff]
    %v1035 = vld [vmem:[#allocation4 + $0x108] sm:$0xff]
    %v1036 = vld [vmem:[#allocation4 + $0x110] sm:$0xff]
    %v1037 = vld [vmem:[#allocation4 + $0x118] sm:$0xff]
    %v1038 = vld [vmem:[#allocation4 + $0x120] sm:$0xff]
    %v1039 = vld [vmem:[#allocation4 + $0x128] sm:$0xff]
    %v1040 = vld [vmem:[#allocation4 + $0x130] sm:$0xff]
    %v1041 = vld [vmem:[#allocation4 + $0x138] sm:$0xff]
    %v1042 = vld [vmem:[#allocation4 + $0x140] sm:$0xff]
    %v1043 = vld [vmem:[#allocation4 + $0x148] sm:$0xff]
    %v1044 = vld [vmem:[#allocation4 + $0x150] sm:$0xff]
    %v1045 = vld [vmem:[#allocation4 + $0x158] sm:$0xff]
    %v1046 = vld [vmem:[#allocation4 + $0x160] sm:$0xff]
    %v1047 = vld [vmem:[#allocation4 + $0x168] sm:$0xff]
    %v1048 = vld [vmem:[#allocation4 + $0x170] sm:$0xff]
    %v1049 = vld [vmem:[#allocation4 + $0x178] sm:$0xff]
    %v1050 = vld [vmem:[#allocation4 + $0x180] sm:$0xff]
    %v1051 = vld [vmem:[#allocation4 + $0x188] sm:$0xff]
    %v1052 = vld [vmem:[#allocation4 + $0x190] sm:$0xff]
    %v1053 = vld [vmem:[#allocation4 + $0x198] sm:$0xff]
    %v1054 = vld [vmem:[#allocation4 + $0x1a0] sm:$0xff]
    %v1055 = vld [vmem:[#allocation4 + $0x1a8] sm:$0xff]
    %v1056 = vld [vmem:[#allocation4 + $0x1b0] sm:$0xff]
    %v1057 = vld [vmem:[#allocation4 + $0x1b8] sm:$0xff]
    %v1058 = vld [vmem:[#allocation4 + $0x1c0] sm:$0xff]
    %v1059 = vld [vmem:[#allocation4 + $0x1c8] sm:$0xff]
    %v1060 = vld [vmem:[#allocation4 + $0x1d0] sm:$0xff]
    %v1061 = vld [vmem:[#allocation4 + $0x1d8] sm:$0xff]
    %v1062 = vld [vmem:[#allocation4 + $0x1e0] sm:$0xff]
    %v1063 = vld [vmem:[#allocation4 + $0x1e8] sm:$0xff]
    %v1064 = vld [vmem:[#allocation4 + $0x1f0] sm:$0xff]
    %v1065 = vld [vmem:[#allocation4 + $0x1f8] sm:$0xff]
    %1066 = vmatprep.subr.mxu0 %v1063
    %1067 = vmatpush1.msra.mxu0 %v1062
    %1068 = vmatprep.subr.mxu0 %v1059
    %1069 = vmatpush1.msra.mxu0 %v1058
    %1070 = vmatprep.subr.mxu0 %v1055
    %1071 = vmatpush1.msra.mxu0 %v1054
    %1072 = vmatprep.subr.mxu0 %v1051
    %1073 = vmatpush1.msra.mxu0 %v1050
    %1074 = vmatprep.subr.mxu0 %v1047
    %1075 = vmatpush1.msra.mxu0 %v1046
    %1076 = vmatprep.subr.mxu0 %v1043
    %1077 = vmatpush1.msra.mxu0 %v1042
    %1078 = vmatprep.subr.mxu0 %v1039
    %1079 = vmatpush1.msra.mxu0 %v1038
    %1080 = vmatprep.subr.mxu0 %v1035
    %1081 = vmatpush1.msra.mxu0 %v1034
    %1082 = vmatprep.subr.mxu0 %v1031
    %1083 = vmatpush1.msra.mxu0 %v1030
    %1084 = vmatprep.subr.mxu0 %v1027
    %1085 = vmatpush1.msra.mxu0 %v1026
    %1086 = vmatprep.subr.mxu0 %v1023
    %1087 = vmatpush1.msra.mxu0 %v1022
    %1088 = vmatprep.subr.mxu0 %v1019
    %1089 = vmatpush1.msra.mxu0 %v1018
    %1090 = vmatprep.subr.mxu0 %v1015
    %1091 = vmatpush1.msra.mxu0 %v1014
    %1092 = vmatprep.subr.mxu0 %v1011
    %1093 = vmatpush1.msra.mxu0 %v1010
    %1094 = vmatprep.subr.mxu0 %v1007
    %1095 = vmatpush1.msra.mxu0 %v1006
    %1096 = vmatprep.subr.mxu0 %v1003
    %1097 = vmatpush1.msra.mxu0 %v1002
    %1098 = vmatprep.subr.mxu0 0.0
    %1099 = vmatpush2.msra.mxu0 0.0
    %1100 = vmatprep.subr.mxu0 0.0
    %1101 = vmatpush2.msra.mxu0 0.0
    %1102 = vmatprep.subr.mxu0 0.0
    %1103 = vmatpush2.msra.mxu0 0.0
    %1104 = vmatprep.subr.mxu0 0.0
    %1105 = vmatpush2.msra.mxu0 0.0
    %1106 = vmatprep.subr.mxu0 0.0
    %1107 = vmatpush2.msra.mxu0 0.0
    %1108 = vmatprep.subr.mxu0 0.0
    %1109 = vmatpush2.msra.mxu0 0.0
    %1110 = vmatprep.subr.mxu0 0.0
    %1111 = vmatpush2.msra.mxu0 0.0
    %1112 = vmatprep.subr.mxu0 0.0
    %1113 = vmatpush2.msra.mxu0 0.0
    %1114 = vmatprep.subr.mxu0 0.0
    %1115 = vmatpush2.msra.mxu0 0.0
    %1116 = vmatprep.subr.mxu0 0.0
    %1117 = vmatpush2.msra.mxu0 0.0
    %1118 = vmatprep.subr.mxu0 0.0
    %1119 = vmatpush2.msra.mxu0 0.0
    %1120 = vmatprep.subr.mxu0 0.0
    %1121 = vmatpush2.msra.mxu0 0.0
    %1122 = vmatprep.subr.mxu0 0.0
    %1123 = vmatpush2.msra.mxu0 0.0
    %1124 = vmatprep.subr.mxu0 0.0
    %1125 = vmatpush2.msra.mxu0 0.0
    %1126 = vmatprep.subr.mxu0 0.0
    %1127 = vmatpush2.msra.mxu0 0.0
    %1128 = vmatprep.subr.mxu0 0.0
    %1129 = vmatpush2.msra.mxu0 0.0
    %1130 = vmatprep.mubr.f32.mxu0 0.0
    %1131 = vmatmul.mubr.f32.gmra.mxu0 %v998
    %v1132 = vpop.f32.mrf.mxu0
    %v1133 = vadd.f32 0.0, %v1132
    %v1134 = vpop.f32.mrf.mxu0
    %v1135 = vadd.f32 0.0, %v1134
    %1136 = vdwg.mxu0
    %1137 = vmatprep.subr.mxu0 %v1065
    %1138 = vmatpush1.msra.mxu0 %v1064
    %1139 = vmatprep.subr.mxu0 %v1061
    %1140 = vmatpush1.msra.mxu0 %v1060
    %1141 = vmatprep.subr.mxu0 %v1057
    %1142 = vmatpush1.msra.mxu0 %v1056
    %1143 = vmatprep.subr.mxu0 %v1053
    %1144 = vmatpush1.msra.mxu0 %v1052
    %1145 = vmatprep.subr.mxu0 %v1049
    %1146 = vmatpush1.msra.mxu0 %v1048
    %1147 = vmatprep.subr.mxu0 %v1045
    %1148 = vmatpush1.msra.mxu0 %v1044
    %1149 = vmatprep.subr.mxu0 %v1041
    %1150 = vmatpush1.msra.mxu0 %v1040
    %1151 = vmatprep.subr.mxu0 %v1037
    %1152 = vmatpush1.msra.mxu0 %v1036
    %1153 = vmatprep.subr.mxu0 %v1033
    %1154 = vmatpush1.msra.mxu0 %v1032
    %1155 = vmatprep.subr.mxu0 %v1029
    %1156 = vmatpush1.msra.mxu0 %v1028
    %1157 = vmatprep.subr.mxu0 %v1025
    %1158 = vmatpush1.msra.mxu0 %v1024
    %1159 = vmatprep.subr.mxu0 %v1021
    %1160 = vmatpush1.msra.mxu0 %v1020
    %1161 = vmatprep.subr.mxu0 %v1017
    %1162 = vmatpush1.msra.mxu0 %v1016
    %1163 = vmatprep.subr.mxu0 %v1013
    %1164 = vmatpush1.msra.mxu0 %v1012
    %1165 = vmatprep.subr.mxu0 %v1009
    %1166 = vmatpush1.msra.mxu0 %v1008
    %1167 = vmatprep.subr.mxu0 %v1005
    %1168 = vmatpush1.msra.mxu0 %v1004
    %1169 = vmatprep.subr.mxu0 0.0
    %1170 = vmatpush2.msra.mxu0 0.0
    %1171 = vmatprep.subr.mxu0 0.0
    %1172 = vmatpush2.msra.mxu0 0.0
    %1173 = vmatprep.subr.mxu0 0.0
    %1174 = vmatpush2.msra.mxu0 0.0
    %1175 = vmatprep.subr.mxu0 0.0
    %1176 = vmatpush2.msra.mxu0 0.0
    %1177 = vmatprep.subr.mxu0 0.0
    %1178 = vmatpush2.msra.mxu0 0.0
    %1179 = vmatprep.subr.mxu0 0.0
    %1180 = vmatpush2.msra.mxu0 0.0
    %1181 = vmatprep.subr.mxu0 0.0
    %1182 = vmatpush2.msra.mxu0 0.0
    %1183 = vmatprep.subr.mxu0 0.0
    %1184 = vmatpush2.msra.mxu0 0.0
    %1185 = vmatprep.subr.mxu0 0.0
    %1186 = vmatpush2.msra.mxu0 0.0
    %1187 = vmatprep.subr.mxu0 0.0
    %1188 = vmatpush2.msra.mxu0 0.0
    %1189 = vmatprep.subr.mxu0 0.0
    %1190 = vmatpush2.msra.mxu0 0.0
    %1191 = vmatprep.subr.mxu0 0.0
    %1192 = vmatpush2.msra.mxu0 0.0
    %1193 = vmatprep.subr.mxu0 0.0
    %1194 = vmatpush2.msra.mxu0 0.0
    %1195 = vmatprep.subr.mxu0 0.0
    %1196 = vmatpush2.msra.mxu0 0.0
    %1197 = vmatprep.subr.mxu0 0.0
    %1198 = vmatpush2.msra.mxu0 0.0
    %1199 = vmatprep.subr.mxu0 0.0
    %1200 = vmatpush2.msra.mxu0 0.0
    %1201 = vmatprep.mubr.f32.mxu0 0.0
    %1202 = vmatmul.mubr.f32.gmra.mxu0 %v998
    %v1203 = vpop.f32.mrf.mxu0
    %v1204 = vadd.f32 0.0, %v1203
    %v1205 = vpop.f32.mrf.mxu0
    %v1206 = vadd.f32 0.0, %v1205
    %1207 = vdwg.mxu0
    %v1212 = vcombine.low %v1133, %v1135
    %v1213 = vcombine.low %v1204, %v1206
    %v1215 = vunpack.c.l.s4 1966171168
    %v1216 = vunpack.c.0.s8 %v1215
    %v1217 = vlaneseq
    %v1218 = vshrl.u32 %v1217, 7
    %v1219 = vsub.s32 %v1216, %v1218
    %v1220 = vrot.slane %v1212, %v1219
    %v1222 = vunpack.c.l.s4 1966171168
    %v1223 = vunpack.c.0.s8 %v1222
    %v1224 = vlaneseq
    %v1225 = vshrl.u32 %v1224, 7
    %v1226 = vsub.s32 %v1223, %v1225
    %v1227 = vrot.slane %v1213, %v1226
    %v1228 = vcombine.low %v1220, %v1227
    %v1230 = vunpack.c.l.s4 1966171168
    %v1231 = vunpack.c.0.s8 %v1230
    %v1232 = vlaneseq
    %v1233 = vshrl.u32 %v1232, 7
    %v1234 = vsub.s32 %v1231, %v1233
    %v1235 = vrot.slane %v1228, %v1234
    %v1237 = vadd.f32 %v1001, %v1235
    %v1238 = vtanh.pop %v1237
    %v1239 = vmul.f32 %v1238, 0.5
    %v1240 = vadd.f32 %v1239, 0.5
    %v1242 = vrot.slane %v1238, 1
    %v1244 = vmul.f32 %v1242, 0.5
    %v1245 = vadd.f32 %v1244, 0.5
    %v1246 = vrot.slane %v1238, 3
    %v1248 = vmul.f32 %v1246, 0.5
    %v1249 = vadd.f32 %v1248, 0.5
    %v1250 = vmul.f32 %v1245, %v996
    %v1251 = vrot.slane %v1238, 2
    %v1253 = vmul.f32 %v1240, %v1251
    %v1254 = vadd.f32 %v1250, %v1253
    %v1255 = vtanh.pop %v1254
    %v1256 = vmul.f32 %v1249, %v1255
    %1257 = vst [vmem:[#allocation3 + $0x3] sm:$0x1] %v1256
    %s1258 = scalar_lea.vmem [#allocation2], 4
    %v1259 = vld [vmem:[%s1258] ss:$8 sm:$0xf]
    %v1260 = vld [vmem:[#allocation4] sm:$0xff]
    %v1261 = vld [vmem:[#allocation4 + $0x8] sm:$0xff]
    %v1262 = vld [vmem:[#allocation4 + $0x10] sm:$0xff]
    %v1263 = vld [vmem:[#allocation4 + $0x18] sm:$0xff]
    %v1264 = vld [vmem:[#allocation4 + $0x20] sm:$0xff]
    %v1265 = vld [vmem:[#allocation4 + $0x28] sm:$0xff]
    %v1266 = vld [vmem:[#allocation4 + $0x30] sm:$0xff]
    %v1267 = vld [vmem:[#allocation4 + $0x38] sm:$0xff]
    %v1268 = vld [vmem:[#allocation4 + $0x40] sm:$0xff]
    %v1269 = vld [vmem:[#allocation4 + $0x48] sm:$0xff]
    %v1270 = vld [vmem:[#allocation4 + $0x50] sm:$0xff]
    %v1271 = vld [vmem:[#allocation4 + $0x58] sm:$0xff]
    %v1272 = vld [vmem:[#allocation4 + $0x60] sm:$0xff]
    %v1273 = vld [vmem:[#allocation4 + $0x68] sm:$0xff]
    %v1274 = vld [vmem:[#allocation4 + $0x70] sm:$0xff]
    %v1275 = vld [vmem:[#allocation4 + $0x78] sm:$0xff]
    %v1276 = vld [vmem:[#allocation4 + $0x80] sm:$0xff]
    %v1277 = vld [vmem:[#allocation4 + $0x88] sm:$0xff]
    %v1278 = vld [vmem:[#allocation4 + $0x90] sm:$0xff]
    %v1279 = vld [vmem:[#allocation4 + $0x98] sm:$0xff]
    %v1280 = vld [vmem:[#allocation4 + $0xa0] sm:$0xff]
    %v1281 = vld [vmem:[#allocation4 + $0xa8] sm:$0xff]
    %v1282 = vld [vmem:[#allocation4 + $0xb0] sm:$0xff]
    %v1283 = vld [vmem:[#allocation4 + $0xb8] sm:$0xff]
    %v1284 = vld [vmem:[#allocation4 + $0xc0] sm:$0xff]
    %v1285 = vld [vmem:[#allocation4 + $0xc8] sm:$0xff]
    %v1286 = vld [vmem:[#allocation4 + $0xd0] sm:$0xff]
    %v1287 = vld [vmem:[#allocation4 + $0xd8] sm:$0xff]
    %v1288 = vld [vmem:[#allocation4 + $0xe0] sm:$0xff]
    %v1289 = vld [vmem:[#allocation4 + $0xe8] sm:$0xff]
    %v1290 = vld [vmem:[#allocation4 + $0xf0] sm:$0xff]
    %v1291 = vld [vmem:[#allocation4 + $0xf8] sm:$0xff]
    %v1292 = vld [vmem:[#allocation4 + $0x100] sm:$0xff]
    %v1293 = vld [vmem:[#allocation4 + $0x108] sm:$0xff]
    %v1294 = vld [vmem:[#allocation4 + $0x110] sm:$0xff]
    %v1295 = vld [vmem:[#allocation4 + $0x118] sm:$0xff]
    %v1296 = vld [vmem:[#allocation4 + $0x120] sm:$0xff]
    %v1297 = vld [vmem:[#allocation4 + $0x128] sm:$0xff]
    %v1298 = vld [vmem:[#allocation4 + $0x130] sm:$0xff]
    %v1299 = vld [vmem:[#allocation4 + $0x138] sm:$0xff]
    %v1300 = vld [vmem:[#allocation4 + $0x140] sm:$0xff]
    %v1301 = vld [vmem:[#allocation4 + $0x148] sm:$0xff]
    %v1302 = vld [vmem:[#allocation4 + $0x150] sm:$0xff]
    %v1303 = vld [vmem:[#allocation4 + $0x158] sm:$0xff]
    %v1304 = vld [vmem:[#allocation4 + $0x160] sm:$0xff]
    %v1305 = vld [vmem:[#allocation4 + $0x168] sm:$0xff]
    %v1306 = vld [vmem:[#allocation4 + $0x170] sm:$0xff]
    %v1307 = vld [vmem:[#allocation4 + $0x178] sm:$0xff]
    %v1308 = vld [vmem:[#allocation4 + $0x180] sm:$0xff]
    %v1309 = vld [vmem:[#allocation4 + $0x188] sm:$0xff]
    %v1310 = vld [vmem:[#allocation4 + $0x190] sm:$0xff]
    %v1311 = vld [vmem:[#allocation4 + $0x198] sm:$0xff]
    %v1312 = vld [vmem:[#allocation4 + $0x1a0] sm:$0xff]
    %v1313 = vld [vmem:[#allocation4 + $0x1a8] sm:$0xff]
    %v1314 = vld [vmem:[#allocation4 + $0x1b0] sm:$0xff]
    %v1315 = vld [vmem:[#allocation4 + $0x1b8] sm:$0xff]
    %v1316 = vld [vmem:[#allocation4 + $0x1c0] sm:$0xff]
    %v1317 = vld [vmem:[#allocation4 + $0x1c8] sm:$0xff]
    %v1318 = vld [vmem:[#allocation4 + $0x1d0] sm:$0xff]
    %v1319 = vld [vmem:[#allocation4 + $0x1d8] sm:$0xff]
    %v1320 = vld [vmem:[#allocation4 + $0x1e0] sm:$0xff]
    %v1321 = vld [vmem:[#allocation4 + $0x1e8] sm:$0xff]
    %v1322 = vld [vmem:[#allocation4 + $0x1f0] sm:$0xff]
    %v1323 = vld [vmem:[#allocation4 + $0x1f8] sm:$0xff]
    %1324 = vmatprep.subr.mxu0 %v1321
    %1325 = vmatpush1.msra.mxu0 %v1320
    %1326 = vmatprep.subr.mxu0 %v1317
    %1327 = vmatpush1.msra.mxu0 %v1316
    %1328 = vmatprep.subr.mxu0 %v1313
    %1329 = vmatpush1.msra.mxu0 %v1312
    %1330 = vmatprep.subr.mxu0 %v1309
    %1331 = vmatpush1.msra.mxu0 %v1308
    %1332 = vmatprep.subr.mxu0 %v1305
    %1333 = vmatpush1.msra.mxu0 %v1304
    %1334 = vmatprep.subr.mxu0 %v1301
    %1335 = vmatpush1.msra.mxu0 %v1300
    %1336 = vmatprep.subr.mxu0 %v1297
    %1337 = vmatpush1.msra.mxu0 %v1296
    %1338 = vmatprep.subr.mxu0 %v1293
    %1339 = vmatpush1.msra.mxu0 %v1292
    %1340 = vmatprep.subr.mxu0 %v1289
    %1341 = vmatpush1.msra.mxu0 %v1288
    %1342 = vmatprep.subr.mxu0 %v1285
    %1343 = vmatpush1.msra.mxu0 %v1284
    %1344 = vmatprep.subr.mxu0 %v1281
    %1345 = vmatpush1.msra.mxu0 %v1280
    %1346 = vmatprep.subr.mxu0 %v1277
    %1347 = vmatpush1.msra.mxu0 %v1276
    %1348 = vmatprep.subr.mxu0 %v1273
    %1349 = vmatpush1.msra.mxu0 %v1272
    %1350 = vmatprep.subr.mxu0 %v1269
    %1351 = vmatpush1.msra.mxu0 %v1268
    %1352 = vmatprep.subr.mxu0 %v1265
    %1353 = vmatpush1.msra.mxu0 %v1264
    %1354 = vmatprep.subr.mxu0 %v1261
    %1355 = vmatpush1.msra.mxu0 %v1260
    %1356 = vmatprep.subr.mxu0 0.0
    %1357 = vmatpush2.msra.mxu0 0.0
    %1358 = vmatprep.subr.mxu0 0.0
    %1359 = vmatpush2.msra.mxu0 0.0
    %1360 = vmatprep.subr.mxu0 0.0
    %1361 = vmatpush2.msra.mxu0 0.0
    %1362 = vmatprep.subr.mxu0 0.0
    %1363 = vmatpush2.msra.mxu0 0.0
    %1364 = vmatprep.subr.mxu0 0.0
    %1365 = vmatpush2.msra.mxu0 0.0
    %1366 = vmatprep.subr.mxu0 0.0
    %1367 = vmatpush2.msra.mxu0 0.0
    %1368 = vmatprep.subr.mxu0 0.0
    %1369 = vmatpush2.msra.mxu0 0.0
    %1370 = vmatprep.subr.mxu0 0.0
    %1371 = vmatpush2.msra.mxu0 0.0
    %1372 = vmatprep.subr.mxu0 0.0
    %1373 = vmatpush2.msra.mxu0 0.0
    %1374 = vmatprep.subr.mxu0 0.0
    %1375 = vmatpush2.msra.mxu0 0.0
    %1376 = vmatprep.subr.mxu0 0.0
    %1377 = vmatpush2.msra.mxu0 0.0
    %1378 = vmatprep.subr.mxu0 0.0
    %1379 = vmatpush2.msra.mxu0 0.0
    %1380 = vmatprep.subr.mxu0 0.0
    %1381 = vmatpush2.msra.mxu0 0.0
    %1382 = vmatprep.subr.mxu0 0.0
    %1383 = vmatpush2.msra.mxu0 0.0
    %1384 = vmatprep.subr.mxu0 0.0
    %1385 = vmatpush2.msra.mxu0 0.0
    %1386 = vmatprep.subr.mxu0 0.0
    %1387 = vmatpush2.msra.mxu0 0.0
    %1388 = vmatprep.mubr.f32.mxu0 0.0
    %1389 = vmatmul.mubr.f32.gmra.mxu0 %v1256
    %v1390 = vpop.f32.mrf.mxu0
    %v1391 = vadd.f32 0.0, %v1390
    %v1392 = vpop.f32.mrf.mxu0
    %v1393 = vadd.f32 0.0, %v1392
    %1394 = vdwg.mxu0
    %1395 = vmatprep.subr.mxu0 %v1323
    %1396 = vmatpush1.msra.mxu0 %v1322
    %1397 = vmatprep.subr.mxu0 %v1319
    %1398 = vmatpush1.msra.mxu0 %v1318
    %1399 = vmatprep.subr.mxu0 %v1315
    %1400 = vmatpush1.msra.mxu0 %v1314
    %1401 = vmatprep.subr.mxu0 %v1311
    %1402 = vmatpush1.msra.mxu0 %v1310
    %1403 = vmatprep.subr.mxu0 %v1307
    %1404 = vmatpush1.msra.mxu0 %v1306
    %1405 = vmatprep.subr.mxu0 %v1303
    %1406 = vmatpush1.msra.mxu0 %v1302
    %1407 = vmatprep.subr.mxu0 %v1299
    %1408 = vmatpush1.msra.mxu0 %v1298
    %1409 = vmatprep.subr.mxu0 %v1295
    %1410 = vmatpush1.msra.mxu0 %v1294
    %1411 = vmatprep.subr.mxu0 %v1291
    %1412 = vmatpush1.msra.mxu0 %v1290
    %1413 = vmatprep.subr.mxu0 %v1287
    %1414 = vmatpush1.msra.mxu0 %v1286
    %1415 = vmatprep.subr.mxu0 %v1283
    %1416 = vmatpush1.msra.mxu0 %v1282
    %1417 = vmatprep.subr.mxu0 %v1279
    %1418 = vmatpush1.msra.mxu0 %v1278
    %1419 = vmatprep.subr.mxu0 %v1275
    %1420 = vmatpush1.msra.mxu0 %v1274
    %1421 = vmatprep.subr.mxu0 %v1271
    %1422 = vmatpush1.msra.mxu0 %v1270
    %1423 = vmatprep.subr.mxu0 %v1267
    %1424 = vmatpush1.msra.mxu0 %v1266
    %1425 = vmatprep.subr.mxu0 %v1263
    %1426 = vmatpush1.msra.mxu0 %v1262
    %1427 = vmatprep.subr.mxu0 0.0
    %1428 = vmatpush2.msra.mxu0 0.0
    %1429 = vmatprep.subr.mxu0 0.0
    %1430 = vmatpush2.msra.mxu0 0.0
    %1431 = vmatprep.subr.mxu0 0.0
    %1432 = vmatpush2.msra.mxu0 0.0
    %1433 = vmatprep.subr.mxu0 0.0
    %1434 = vmatpush2.msra.mxu0 0.0
    %1435 = vmatprep.subr.mxu0 0.0
    %1436 = vmatpush2.msra.mxu0 0.0
    %1437 = vmatprep.subr.mxu0 0.0
    %1438 = vmatpush2.msra.mxu0 0.0
    %1439 = vmatprep.subr.mxu0 0.0
    %1440 = vmatpush2.msra.mxu0 0.0
    %1441 = vmatprep.subr.mxu0 0.0
    %1442 = vmatpush2.msra.mxu0 0.0
    %1443 = vmatprep.subr.mxu0 0.0
    %1444 = vmatpush2.msra.mxu0 0.0
    %1445 = vmatprep.subr.mxu0 0.0
    %1446 = vmatpush2.msra.mxu0 0.0
    %1447 = vmatprep.subr.mxu0 0.0
    %1448 = vmatpush2.msra.mxu0 0.0
    %1449 = vmatprep.subr.mxu0 0.0
    %1450 = vmatpush2.msra.mxu0 0.0
    %1451 = vmatprep.subr.mxu0 0.0
    %1452 = vmatpush2.msra.mxu0 0.0
    %1453 = vmatprep.subr.mxu0 0.0
    %1454 = vmatpush2.msra.mxu0 0.0
    %1455 = vmatprep.subr.mxu0 0.0
    %1456 = vmatpush2.msra.mxu0 0.0
    %1457 = vmatprep.subr.mxu0 0.0
    %1458 = vmatpush2.msra.mxu0 0.0
    %1459 = vmatprep.mubr.f32.mxu0 0.0
    %1460 = vmatmul.mubr.f32.gmra.mxu0 %v1256
    %v1461 = vpop.f32.mrf.mxu0
    %v1462 = vadd.f32 0.0, %v1461
    %v1463 = vpop.f32.mrf.mxu0
    %v1464 = vadd.f32 0.0, %v1463
    %1465 = vdwg.mxu0
    %v1470 = vcombine.low %v1391, %v1393
    %v1471 = vcombine.low %v1462, %v1464
    %v1473 = vunpack.c.l.s4 1966171168
    %v1474 = vunpack.c.0.s8 %v1473
    %v1475 = vlaneseq
    %v1476 = vshrl.u32 %v1475, 7
    %v1477 = vsub.s32 %v1474, %v1476
    %v1478 = vrot.slane %v1470, %v1477
    %v1480 = vunpack.c.l.s4 1966171168
    %v1481 = vunpack.c.0.s8 %v1480
    %v1482 = vlaneseq
    %v1483 = vshrl.u32 %v1482, 7
    %v1484 = vsub.s32 %v1481, %v1483
    %v1485 = vrot.slane %v1471, %v1484
    %v1486 = vcombine.low %v1478, %v1485
    %v1488 = vunpack.c.l.s4 1966171168
    %v1489 = vunpack.c.0.s8 %v1488
    %v1490 = vlaneseq
    %v1491 = vshrl.u32 %v1490, 7
    %v1492 = vsub.s32 %v1489, %v1491
    %v1493 = vrot.slane %v1486, %v1492
    %v1495 = vadd.f32 %v1259, %v1493
    %v1496 = vtanh.pop %v1495
    %v1497 = vmul.f32 %v1496, 0.5
    %v1498 = vadd.f32 %v1497, 0.5
    %v1500 = vrot.slane %v1496, 1
    %v1502 = vmul.f32 %v1500, 0.5
    %v1503 = vadd.f32 %v1502, 0.5
    %v1504 = vrot.slane %v1496, 3
    %v1506 = vmul.f32 %v1504, 0.5
    %v1507 = vadd.f32 %v1506, 0.5
    %v1508 = vmul.f32 %v1503, %v1254
    %v1509 = vrot.slane %v1496, 2
    %v1511 = vmul.f32 %v1498, %v1509
    %v1512 = vadd.f32 %v1508, %v1511
    %v1513 = vtanh.pop %v1512
    %v1514 = vmul.f32 %v1507, %v1513
    %1515 = vst [vmem:[#allocation3 + $0x4] sm:$0x1] %v1514
    %s1516 = scalar_lea.vmem [#allocation2], 5
    %v1517 = vld [vmem:[%s1516] ss:$8 sm:$0xf]
    %v1518 = vld [vmem:[#allocation4] sm:$0xff]
    %v1519 = vld [vmem:[#allocation4 + $0x8] sm:$0xff]
    %v1520 = vld [vmem:[#allocation4 + $0x10] sm:$0xff]
    %v1521 = vld [vmem:[#allocation4 + $0x18] sm:$0xff]
    %v1522 = vld [vmem:[#allocation4 + $0x20] sm:$0xff]
    %v1523 = vld [vmem:[#allocation4 + $0x28] sm:$0xff]
    %v1524 = vld [vmem:[#allocation4 + $0x30] sm:$0xff]
    %v1525 = vld [vmem:[#allocation4 + $0x38] sm:$0xff]
    %v1526 = vld [vmem:[#allocation4 + $0x40] sm:$0xff]
    %v1527 = vld [vmem:[#allocation4 + $0x48] sm:$0xff]
    %v1528 = vld [vmem:[#allocation4 + $0x50] sm:$0xff]
    %v1529 = vld [vmem:[#allocation4 + $0x58] sm:$0xff]
    %v1530 = vld [vmem:[#allocation4 + $0x60] sm:$0xff]
    %v1531 = vld [vmem:[#allocation4 + $0x68] sm:$0xff]
    %v1532 = vld [vmem:[#allocation4 + $0x70] sm:$0xff]
    %v1533 = vld [vmem:[#allocation4 + $0x78] sm:$0xff]
    %v1534 = vld [vmem:[#allocation4 + $0x80] sm:$0xff]
    %v1535 = vld [vmem:[#allocation4 + $0x88] sm:$0xff]
    %v1536 = vld [vmem:[#allocation4 + $0x90] sm:$0xff]
    %v1537 = vld [vmem:[#allocation4 + $0x98] sm:$0xff]
    %v1538 = vld [vmem:[#allocation4 + $0xa0] sm:$0xff]
    %v1539 = vld [vmem:[#allocation4 + $0xa8] sm:$0xff]
    %v1540 = vld [vmem:[#allocation4 + $0xb0] sm:$0xff]
    %v1541 = vld [vmem:[#allocation4 + $0xb8] sm:$0xff]
    %v1542 = vld [vmem:[#allocation4 + $0xc0] sm:$0xff]
    %v1543 = vld [vmem:[#allocation4 + $0xc8] sm:$0xff]
    %v1544 = vld [vmem:[#allocation4 + $0xd0] sm:$0xff]
    %v1545 = vld [vmem:[#allocation4 + $0xd8] sm:$0xff]
    %v1546 = vld [vmem:[#allocation4 + $0xe0] sm:$0xff]
    %v1547 = vld [vmem:[#allocation4 + $0xe8] sm:$0xff]
    %v1548 = vld [vmem:[#allocation4 + $0xf0] sm:$0xff]
    %v1549 = vld [vmem:[#allocation4 + $0xf8] sm:$0xff]
    %v1550 = vld [vmem:[#allocation4 + $0x100] sm:$0xff]
    %v1551 = vld [vmem:[#allocation4 + $0x108] sm:$0xff]
    %v1552 = vld [vmem:[#allocation4 + $0x110] sm:$0xff]
    %v1553 = vld [vmem:[#allocation4 + $0x118] sm:$0xff]
    %v1554 = vld [vmem:[#allocation4 + $0x120] sm:$0xff]
    %v1555 = vld [vmem:[#allocation4 + $0x128] sm:$0xff]
    %v1556 = vld [vmem:[#allocation4 + $0x130] sm:$0xff]
    %v1557 = vld [vmem:[#allocation4 + $0x138] sm:$0xff]
    %v1558 = vld [vmem:[#allocation4 + $0x140] sm:$0xff]
    %v1559 = vld [vmem:[#allocation4 + $0x148] sm:$0xff]
    %v1560 = vld [vmem:[#allocation4 + $0x150] sm:$0xff]
    %v1561 = vld [vmem:[#allocation4 + $0x158] sm:$0xff]
    %v1562 = vld [vmem:[#allocation4 + $0x160] sm:$0xff]
    %v1563 = vld [vmem:[#allocation4 + $0x168] sm:$0xff]
    %v1564 = vld [vmem:[#allocation4 + $0x170] sm:$0xff]
    %v1565 = vld [vmem:[#allocation4 + $0x178] sm:$0xff]
    %v1566 = vld [vmem:[#allocation4 + $0x180] sm:$0xff]
    %v1567 = vld [vmem:[#allocation4 + $0x188] sm:$0xff]
    %v1568 = vld [vmem:[#allocation4 + $0x190] sm:$0xff]
    %v1569 = vld [vmem:[#allocation4 + $0x198] sm:$0xff]
    %v1570 = vld [vmem:[#allocation4 + $0x1a0] sm:$0xff]
    %v1571 = vld [vmem:[#allocation4 + $0x1a8] sm:$0xff]
    %v1572 = vld [vmem:[#allocation4 + $0x1b0] sm:$0xff]
    %v1573 = vld [vmem:[#allocation4 + $0x1b8] sm:$0xff]
    %v1574 = vld [vmem:[#allocation4 + $0x1c0] sm:$0xff]
    %v1575 = vld [vmem:[#allocation4 + $0x1c8] sm:$0xff]
    %v1576 = vld [vmem:[#allocation4 + $0x1d0] sm:$0xff]
    %v1577 = vld [vmem:[#allocation4 + $0x1d8] sm:$0xff]
    %v1578 = vld [vmem:[#allocation4 + $0x1e0] sm:$0xff]
    %v1579 = vld [vmem:[#allocation4 + $0x1e8] sm:$0xff]
    %v1580 = vld [vmem:[#allocation4 + $0x1f0] sm:$0xff]
    %v1581 = vld [vmem:[#allocation4 + $0x1f8] sm:$0xff]
    %1582 = vmatprep.subr.mxu0 %v1579
    %1583 = vmatpush1.msra.mxu0 %v1578
    %1584 = vmatprep.subr.mxu0 %v1575
    %1585 = vmatpush1.msra.mxu0 %v1574
    %1586 = vmatprep.subr.mxu0 %v1571
    %1587 = vmatpush1.msra.mxu0 %v1570
    %1588 = vmatprep.subr.mxu0 %v1567
    %1589 = vmatpush1.msra.mxu0 %v1566
    %1590 = vmatprep.subr.mxu0 %v1563
    %1591 = vmatpush1.msra.mxu0 %v1562
    %1592 = vmatprep.subr.mxu0 %v1559
    %1593 = vmatpush1.msra.mxu0 %v1558
    %1594 = vmatprep.subr.mxu0 %v1555
    %1595 = vmatpush1.msra.mxu0 %v1554
    %1596 = vmatprep.subr.mxu0 %v1551
    %1597 = vmatpush1.msra.mxu0 %v1550
    %1598 = vmatprep.subr.mxu0 %v1547
    %1599 = vmatpush1.msra.mxu0 %v1546
    %1600 = vmatprep.subr.mxu0 %v1543
    %1601 = vmatpush1.msra.mxu0 %v1542
    %1602 = vmatprep.subr.mxu0 %v1539
    %1603 = vmatpush1.msra.mxu0 %v1538
    %1604 = vmatprep.subr.mxu0 %v1535
    %1605 = vmatpush1.msra.mxu0 %v1534
    %1606 = vmatprep.subr.mxu0 %v1531
    %1607 = vmatpush1.msra.mxu0 %v1530
    %1608 = vmatprep.subr.mxu0 %v1527
    %1609 = vmatpush1.msra.mxu0 %v1526
    %1610 = vmatprep.subr.mxu0 %v1523
    %1611 = vmatpush1.msra.mxu0 %v1522
    %1612 = vmatprep.subr.mxu0 %v1519
    %1613 = vmatpush1.msra.mxu0 %v1518
    %1614 = vmatprep.subr.mxu0 0.0
    %1615 = vmatpush2.msra.mxu0 0.0
    %1616 = vmatprep.subr.mxu0 0.0
    %1617 = vmatpush2.msra.mxu0 0.0
    %1618 = vmatprep.subr.mxu0 0.0
    %1619 = vmatpush2.msra.mxu0 0.0
    %1620 = vmatprep.subr.mxu0 0.0
    %1621 = vmatpush2.msra.mxu0 0.0
    %1622 = vmatprep.subr.mxu0 0.0
    %1623 = vmatpush2.msra.mxu0 0.0
    %1624 = vmatprep.subr.mxu0 0.0
    %1625 = vmatpush2.msra.mxu0 0.0
    %1626 = vmatprep.subr.mxu0 0.0
    %1627 = vmatpush2.msra.mxu0 0.0
    %1628 = vmatprep.subr.mxu0 0.0
    %1629 = vmatpush2.msra.mxu0 0.0
    %1630 = vmatprep.subr.mxu0 0.0
    %1631 = vmatpush2.msra.mxu0 0.0
    %1632 = vmatprep.subr.mxu0 0.0
    %1633 = vmatpush2.msra.mxu0 0.0
    %1634 = vmatprep.subr.mxu0 0.0
    %1635 = vmatpush2.msra.mxu0 0.0
    %1636 = vmatprep.subr.mxu0 0.0
    %1637 = vmatpush2.msra.mxu0 0.0
    %1638 = vmatprep.subr.mxu0 0.0
    %1639 = vmatpush2.msra.mxu0 0.0
    %1640 = vmatprep.subr.mxu0 0.0
    %1641 = vmatpush2.msra.mxu0 0.0
    %1642 = vmatprep.subr.mxu0 0.0
    %1643 = vmatpush2.msra.mxu0 0.0
    %1644 = vmatprep.subr.mxu0 0.0
    %1645 = vmatpush2.msra.mxu0 0.0
    %1646 = vmatprep.mubr.f32.mxu0 0.0
    %1647 = vmatmul.mubr.f32.gmra.mxu0 %v1514
    %v1648 = vpop.f32.mrf.mxu0
    %v1649 = vadd.f32 0.0, %v1648
    %v1650 = vpop.f32.mrf.mxu0
    %v1651 = vadd.f32 0.0, %v1650
    %1652 = vdwg.mxu0
    %1653 = vmatprep.subr.mxu0 %v1581
    %1654 = vmatpush1.msra.mxu0 %v1580
    %1655 = vmatprep.subr.mxu0 %v1577
    %1656 = vmatpush1.msra.mxu0 %v1576
    %1657 = vmatprep.subr.mxu0 %v1573
    %1658 = vmatpush1.msra.mxu0 %v1572
    %1659 = vmatprep.subr.mxu0 %v1569
    %1660 = vmatpush1.msra.mxu0 %v1568
    %1661 = vmatprep.subr.mxu0 %v1565
    %1662 = vmatpush1.msra.mxu0 %v1564
    %1663 = vmatprep.subr.mxu0 %v1561
    %1664 = vmatpush1.msra.mxu0 %v1560
    %1665 = vmatprep.subr.mxu0 %v1557
    %1666 = vmatpush1.msra.mxu0 %v1556
    %1667 = vmatprep.subr.mxu0 %v1553
    %1668 = vmatpush1.msra.mxu0 %v1552
    %1669 = vmatprep.subr.mxu0 %v1549
    %1670 = vmatpush1.msra.mxu0 %v1548
    %1671 = vmatprep.subr.mxu0 %v1545
    %1672 = vmatpush1.msra.mxu0 %v1544
    %1673 = vmatprep.subr.mxu0 %v1541
    %1674 = vmatpush1.msra.mxu0 %v1540
    %1675 = vmatprep.subr.mxu0 %v1537
    %1676 = vmatpush1.msra.mxu0 %v1536
    %1677 = vmatprep.subr.mxu0 %v1533
    %1678 = vmatpush1.msra.mxu0 %v1532
    %1679 = vmatprep.subr.mxu0 %v1529
    %1680 = vmatpush1.msra.mxu0 %v1528
    %1681 = vmatprep.subr.mxu0 %v1525
    %1682 = vmatpush1.msra.mxu0 %v1524
    %1683 = vmatprep.subr.mxu0 %v1521
    %1684 = vmatpush1.msra.mxu0 %v1520
    %1685 = vmatprep.subr.mxu0 0.0
    %1686 = vmatpush2.msra.mxu0 0.0
    %1687 = vmatprep.subr.mxu0 0.0
    %1688 = vmatpush2.msra.mxu0 0.0
    %1689 = vmatprep.subr.mxu0 0.0
    %1690 = vmatpush2.msra.mxu0 0.0
    %1691 = vmatprep.subr.mxu0 0.0
    %1692 = vmatpush2.msra.mxu0 0.0
    %1693 = vmatprep.subr.mxu0 0.0
    %1694 = vmatpush2.msra.mxu0 0.0
    %1695 = vmatprep.subr.mxu0 0.0
    %1696 = vmatpush2.msra.mxu0 0.0
    %1697 = vmatprep.subr.mxu0 0.0
    %1698 = vmatpush2.msra.mxu0 0.0
    %1699 = vmatprep.subr.mxu0 0.0
    %1700 = vmatpush2.msra.mxu0 0.0
    %1701 = vmatprep.subr.mxu0 0.0
    %1702 = vmatpush2.msra.mxu0 0.0
    %1703 = vmatprep.subr.mxu0 0.0
    %1704 = vmatpush2.msra.mxu0 0.0
    %1705 = vmatprep.subr.mxu0 0.0
    %1706 = vmatpush2.msra.mxu0 0.0
    %1707 = vmatprep.subr.mxu0 0.0
    %1708 = vmatpush2.msra.mxu0 0.0
    %1709 = vmatprep.subr.mxu0 0.0
    %1710 = vmatpush2.msra.mxu0 0.0
    %1711 = vmatprep.subr.mxu0 0.0
    %1712 = vmatpush2.msra.mxu0 0.0
    %1713 = vmatprep.subr.mxu0 0.0
    %1714 = vmatpush2.msra.mxu0 0.0
    %1715 = vmatprep.subr.mxu0 0.0
    %1716 = vmatpush2.msra.mxu0 0.0
    %1717 = vmatprep.mubr.f32.mxu0 0.0
    %1718 = vmatmul.mubr.f32.gmra.mxu0 %v1514
    %v1719 = vpop.f32.mrf.mxu0
    %v1720 = vadd.f32 0.0, %v1719
    %v1721 = vpop.f32.mrf.mxu0
    %v1722 = vadd.f32 0.0, %v1721
    %1723 = vdwg.mxu0
    %v1728 = vcombine.low %v1649, %v1651
    %v1729 = vcombine.low %v1720, %v1722
    %v1731 = vunpack.c.l.s4 1966171168
    %v1732 = vunpack.c.0.s8 %v1731
    %v1733 = vlaneseq
    %v1734 = vshrl.u32 %v1733, 7
    %v1735 = vsub.s32 %v1732, %v1734
    %v1736 = vrot.slane %v1728, %v1735
    %v1738 = vunpack.c.l.s4 1966171168
    %v1739 = vunpack.c.0.s8 %v1738
    %v1740 = vlaneseq
    %v1741 = vshrl.u32 %v1740, 7
    %v1742 = vsub.s32 %v1739, %v1741
    %v1743 = vrot.slane %v1729, %v1742
    %v1744 = vcombine.low %v1736, %v1743
    %v1746 = vunpack.c.l.s4 1966171168
    %v1747 = vunpack.c.0.s8 %v1746
    %v1748 = vlaneseq
    %v1749 = vshrl.u32 %v1748, 7
    %v1750 = vsub.s32 %v1747, %v1749
    %v1751 = vrot.slane %v1744, %v1750
    %v1753 = vadd.f32 %v1517, %v1751
    %v1754 = vtanh.pop %v1753
    %v1755 = vmul.f32 %v1754, 0.5
    %v1756 = vadd.f32 %v1755, 0.5
    %v1758 = vrot.slane %v1754, 1
    %v1760 = vmul.f32 %v1758, 0.5
    %v1761 = vadd.f32 %v1760, 0.5
    %v1762 = vrot.slane %v1754, 3
    %v1764 = vmul.f32 %v1762, 0.5
    %v1765 = vadd.f32 %v1764, 0.5
    %v1766 = vmul.f32 %v1761, %v1512
    %v1767 = vrot.slane %v1754, 2
    %v1769 = vmul.f32 %v1756, %v1767
    %v1770 = vadd.f32 %v1766, %v1769
    %v1771 = vtanh.pop %v1770
    %v1772 = vmul.f32 %v1765, %v1771
    %1773 = vst [vmem:[#allocation3 + $0x5] sm:$0x1] %v1772
    %s1774 = scalar_lea.vmem [#allocation2], 6
    %v1775 = vld [vmem:[%s1774] ss:$8 sm:$0xf]
    %v1776 = vld [vmem:[#allocation4] sm:$0xff]
    %v1777 = vld [vmem:[#allocation4 + $0x8] sm:$0xff]
    %v1778 = vld [vmem:[#allocation4 + $0x10] sm:$0xff]
    %v1779 = vld [vmem:[#allocation4 + $0x18] sm:$0xff]
    %v1780 = vld [vmem:[#allocation4 + $0x20] sm:$0xff]
    %v1781 = vld [vmem:[#allocation4 + $0x28] sm:$0xff]
    %v1782 = vld [vmem:[#allocation4 + $0x30] sm:$0xff]
    %v1783 = vld [vmem:[#allocation4 + $0x38] sm:$0xff]
    %v1784 = vld [vmem:[#allocation4 + $0x40] sm:$0xff]
    %v1785 = vld [vmem:[#allocation4 + $0x48] sm:$0xff]
    %v1786 = vld [vmem:[#allocation4 + $0x50] sm:$0xff]
    %v1787 = vld [vmem:[#allocation4 + $0x58] sm:$0xff]
    %v1788 = vld [vmem:[#allocation4 + $0x60] sm:$0xff]
    %v1789 = vld [vmem:[#allocation4 + $0x68] sm:$0xff]
    %v1790 = vld [vmem:[#allocation4 + $0x70] sm:$0xff]
    %v1791 = vld [vmem:[#allocation4 + $0x78] sm:$0xff]
    %v1792 = vld [vmem:[#allocation4 + $0x80] sm:$0xff]
    %v1793 = vld [vmem:[#allocation4 + $0x88] sm:$0xff]
    %v1794 = vld [vmem:[#allocation4 + $0x90] sm:$0xff]
    %v1795 = vld [vmem:[#allocation4 + $0x98] sm:$0xff]
    %v1796 = vld [vmem:[#allocation4 + $0xa0] sm:$0xff]
    %v1797 = vld [vmem:[#allocation4 + $0xa8] sm:$0xff]
    %v1798 = vld [vmem:[#allocation4 + $0xb0] sm:$0xff]
    %v1799 = vld [vmem:[#allocation4 + $0xb8] sm:$0xff]
    %v1800 = vld [vmem:[#allocation4 + $0xc0] sm:$0xff]
    %v1801 = vld [vmem:[#allocation4 + $0xc8] sm:$0xff]
    %v1802 = vld [vmem:[#allocation4 + $0xd0] sm:$0xff]
    %v1803 = vld [vmem:[#allocation4 + $0xd8] sm:$0xff]
    %v1804 = vld [vmem:[#allocation4 + $0xe0] sm:$0xff]
    %v1805 = vld [vmem:[#allocation4 + $0xe8] sm:$0xff]
    %v1806 = vld [vmem:[#allocation4 + $0xf0] sm:$0xff]
    %v1807 = vld [vmem:[#allocation4 + $0xf8] sm:$0xff]
    %v1808 = vld [vmem:[#allocation4 + $0x100] sm:$0xff]
    %v1809 = vld [vmem:[#allocation4 + $0x108] sm:$0xff]
    %v1810 = vld [vmem:[#allocation4 + $0x110] sm:$0xff]
    %v1811 = vld [vmem:[#allocation4 + $0x118] sm:$0xff]
    %v1812 = vld [vmem:[#allocation4 + $0x120] sm:$0xff]
    %v1813 = vld [vmem:[#allocation4 + $0x128] sm:$0xff]
    %v1814 = vld [vmem:[#allocation4 + $0x130] sm:$0xff]
    %v1815 = vld [vmem:[#allocation4 + $0x138] sm:$0xff]
    %v1816 = vld [vmem:[#allocation4 + $0x140] sm:$0xff]
    %v1817 = vld [vmem:[#allocation4 + $0x148] sm:$0xff]
    %v1818 = vld [vmem:[#allocation4 + $0x150] sm:$0xff]
    %v1819 = vld [vmem:[#allocation4 + $0x158] sm:$0xff]
    %v1820 = vld [vmem:[#allocation4 + $0x160] sm:$0xff]
    %v1821 = vld [vmem:[#allocation4 + $0x168] sm:$0xff]
    %v1822 = vld [vmem:[#allocation4 + $0x170] sm:$0xff]
    %v1823 = vld [vmem:[#allocation4 + $0x178] sm:$0xff]
    %v1824 = vld [vmem:[#allocation4 + $0x180] sm:$0xff]
    %v1825 = vld [vmem:[#allocation4 + $0x188] sm:$0xff]
    %v1826 = vld [vmem:[#allocation4 + $0x190] sm:$0xff]
    %v1827 = vld [vmem:[#allocation4 + $0x198] sm:$0xff]
    %v1828 = vld [vmem:[#allocation4 + $0x1a0] sm:$0xff]
    %v1829 = vld [vmem:[#allocation4 + $0x1a8] sm:$0xff]
    %v1830 = vld [vmem:[#allocation4 + $0x1b0] sm:$0xff]
    %v1831 = vld [vmem:[#allocation4 + $0x1b8] sm:$0xff]
    %v1832 = vld [vmem:[#allocation4 + $0x1c0] sm:$0xff]
    %v1833 = vld [vmem:[#allocation4 + $0x1c8] sm:$0xff]
    %v1834 = vld [vmem:[#allocation4 + $0x1d0] sm:$0xff]
    %v1835 = vld [vmem:[#allocation4 + $0x1d8] sm:$0xff]
    %v1836 = vld [vmem:[#allocation4 + $0x1e0] sm:$0xff]
    %v1837 = vld [vmem:[#allocation4 + $0x1e8] sm:$0xff]
    %v1838 = vld [vmem:[#allocation4 + $0x1f0] sm:$0xff]
    %v1839 = vld [vmem:[#allocation4 + $0x1f8] sm:$0xff]
    %1840 = vmatprep.subr.mxu0 %v1837
    %1841 = vmatpush1.msra.mxu0 %v1836
    %1842 = vmatprep.subr.mxu0 %v1833
    %1843 = vmatpush1.msra.mxu0 %v1832
    %1844 = vmatprep.subr.mxu0 %v1829
    %1845 = vmatpush1.msra.mxu0 %v1828
    %1846 = vmatprep.subr.mxu0 %v1825
    %1847 = vmatpush1.msra.mxu0 %v1824
    %1848 = vmatprep.subr.mxu0 %v1821
    %1849 = vmatpush1.msra.mxu0 %v1820
    %1850 = vmatprep.subr.mxu0 %v1817
    %1851 = vmatpush1.msra.mxu0 %v1816
    %1852 = vmatprep.subr.mxu0 %v1813
    %1853 = vmatpush1.msra.mxu0 %v1812
    %1854 = vmatprep.subr.mxu0 %v1809
    %1855 = vmatpush1.msra.mxu0 %v1808
    %1856 = vmatprep.subr.mxu0 %v1805
    %1857 = vmatpush1.msra.mxu0 %v1804
    %1858 = vmatprep.subr.mxu0 %v1801
    %1859 = vmatpush1.msra.mxu0 %v1800
    %1860 = vmatprep.subr.mxu0 %v1797
    %1861 = vmatpush1.msra.mxu0 %v1796
    %1862 = vmatprep.subr.mxu0 %v1793
    %1863 = vmatpush1.msra.mxu0 %v1792
    %1864 = vmatprep.subr.mxu0 %v1789
    %1865 = vmatpush1.msra.mxu0 %v1788
    %1866 = vmatprep.subr.mxu0 %v1785
    %1867 = vmatpush1.msra.mxu0 %v1784
    %1868 = vmatprep.subr.mxu0 %v1781
    %1869 = vmatpush1.msra.mxu0 %v1780
    %1870 = vmatprep.subr.mxu0 %v1777
    %1871 = vmatpush1.msra.mxu0 %v1776
    %1872 = vmatprep.subr.mxu0 0.0
    %1873 = vmatpush2.msra.mxu0 0.0
    %1874 = vmatprep.subr.mxu0 0.0
    %1875 = vmatpush2.msra.mxu0 0.0
    %1876 = vmatprep.subr.mxu0 0.0
    %1877 = vmatpush2.msra.mxu0 0.0
    %1878 = vmatprep.subr.mxu0 0.0
    %1879 = vmatpush2.msra.mxu0 0.0
    %1880 = vmatprep.subr.mxu0 0.0
    %1881 = vmatpush2.msra.mxu0 0.0
    %1882 = vmatprep.subr.mxu0 0.0
    %1883 = vmatpush2.msra.mxu0 0.0
    %1884 = vmatprep.subr.mxu0 0.0
    %1885 = vmatpush2.msra.mxu0 0.0
    %1886 = vmatprep.subr.mxu0 0.0
    %1887 = vmatpush2.msra.mxu0 0.0
    %1888 = vmatprep.subr.mxu0 0.0
    %1889 = vmatpush2.msra.mxu0 0.0
    %1890 = vmatprep.subr.mxu0 0.0
    %1891 = vmatpush2.msra.mxu0 0.0
    %1892 = vmatprep.subr.mxu0 0.0
    %1893 = vmatpush2.msra.mxu0 0.0
    %1894 = vmatprep.subr.mxu0 0.0
    %1895 = vmatpush2.msra.mxu0 0.0
    %1896 = vmatprep.subr.mxu0 0.0
    %1897 = vmatpush2.msra.mxu0 0.0
    %1898 = vmatprep.subr.mxu0 0.0
    %1899 = vmatpush2.msra.mxu0 0.0
    %1900 = vmatprep.subr.mxu0 0.0
    %1901 = vmatpush2.msra.mxu0 0.0
    %1902 = vmatprep.subr.mxu0 0.0
    %1903 = vmatpush2.msra.mxu0 0.0
    %1904 = vmatprep.mubr.f32.mxu0 0.0
    %1905 = vmatmul.mubr.f32.gmra.mxu0 %v1772
    %v1906 = vpop.f32.mrf.mxu0
    %v1907 = vadd.f32 0.0, %v1906
    %v1908 = vpop.f32.mrf.mxu0
    %v1909 = vadd.f32 0.0, %v1908
    %1910 = vdwg.mxu0
    %1911 = vmatprep.subr.mxu0 %v1839
    %1912 = vmatpush1.msra.mxu0 %v1838
    %1913 = vmatprep.subr.mxu0 %v1835
    %1914 = vmatpush1.msra.mxu0 %v1834
    %1915 = vmatprep.subr.mxu0 %v1831
    %1916 = vmatpush1.msra.mxu0 %v1830
    %1917 = vmatprep.subr.mxu0 %v1827
    %1918 = vmatpush1.msra.mxu0 %v1826
    %1919 = vmatprep.subr.mxu0 %v1823
    %1920 = vmatpush1.msra.mxu0 %v1822
    %1921 = vmatprep.subr.mxu0 %v1819
    %1922 = vmatpush1.msra.mxu0 %v1818
    %1923 = vmatprep.subr.mxu0 %v1815
    %1924 = vmatpush1.msra.mxu0 %v1814
    %1925 = vmatprep.subr.mxu0 %v1811
    %1926 = vmatpush1.msra.mxu0 %v1810
    %1927 = vmatprep.subr.mxu0 %v1807
    %1928 = vmatpush1.msra.mxu0 %v1806
    %1929 = vmatprep.subr.mxu0 %v1803
    %1930 = vmatpush1.msra.mxu0 %v1802
    %1931 = vmatprep.subr.mxu0 %v1799
    %1932 = vmatpush1.msra.mxu0 %v1798
    %1933 = vmatprep.subr.mxu0 %v1795
    %1934 = vmatpush1.msra.mxu0 %v1794
    %1935 = vmatprep.subr.mxu0 %v1791
    %1936 = vmatpush1.msra.mxu0 %v1790
    %1937 = vmatprep.subr.mxu0 %v1787
    %1938 = vmatpush1.msra.mxu0 %v1786
    %1939 = vmatprep.subr.mxu0 %v1783
    %1940 = vmatpush1.msra.mxu0 %v1782
    %1941 = vmatprep.subr.mxu0 %v1779
    %1942 = vmatpush1.msra.mxu0 %v1778
    %1943 = vmatprep.subr.mxu0 0.0
    %1944 = vmatpush2.msra.mxu0 0.0
    %1945 = vmatprep.subr.mxu0 0.0
    %1946 = vmatpush2.msra.mxu0 0.0
    %1947 = vmatprep.subr.mxu0 0.0
    %1948 = vmatpush2.msra.mxu0 0.0
    %1949 = vmatprep.subr.mxu0 0.0
    %1950 = vmatpush2.msra.mxu0 0.0
    %1951 = vmatprep.subr.mxu0 0.0
    %1952 = vmatpush2.msra.mxu0 0.0
    %1953 = vmatprep.subr.mxu0 0.0
    %1954 = vmatpush2.msra.mxu0 0.0
    %1955 = vmatprep.subr.mxu0 0.0
    %1956 = vmatpush2.msra.mxu0 0.0
    %1957 = vmatprep.subr.mxu0 0.0
    %1958 = vmatpush2.msra.mxu0 0.0
    %1959 = vmatprep.subr.mxu0 0.0
    %1960 = vmatpush2.msra.mxu0 0.0
    %1961 = vmatprep.subr.mxu0 0.0
    %1962 = vmatpush2.msra.mxu0 0.0
    %1963 = vmatprep.subr.mxu0 0.0
    %1964 = vmatpush2.msra.mxu0 0.0
    %1965 = vmatprep.subr.mxu0 0.0
    %1966 = vmatpush2.msra.mxu0 0.0
    %1967 = vmatprep.subr.mxu0 0.0
    %1968 = vmatpush2.msra.mxu0 0.0
    %1969 = vmatprep.subr.mxu0 0.0
    %1970 = vmatpush2.msra.mxu0 0.0
    %1971 = vmatprep.subr.mxu0 0.0
    %1972 = vmatpush2.msra.mxu0 0.0
    %1973 = vmatprep.subr.mxu0 0.0
    %1974 = vmatpush2.msra.mxu0 0.0
    %1975 = vmatprep.mubr.f32.mxu0 0.0
    %1976 = vmatmul.mubr.f32.gmra.mxu0 %v1772
    %v1977 = vpop.f32.mrf.mxu0
    %v1978 = vadd.f32 0.0, %v1977
    %v1979 = vpop.f32.mrf.mxu0
    %v1980 = vadd.f32 0.0, %v1979
    %1981 = vdwg.mxu0
    %v1986 = vcombine.low %v1907, %v1909
    %v1987 = vcombine.low %v1978, %v1980
    %v1989 = vunpack.c.l.s4 1966171168
    %v1990 = vunpack.c.0.s8 %v1989
    %v1991 = vlaneseq
    %v1992 = vshrl.u32 %v1991, 7
    %v1993 = vsub.s32 %v1990, %v1992
    %v1994 = vrot.slane %v1986, %v1993
    %v1996 = vunpack.c.l.s4 1966171168
    %v1997 = vunpack.c.0.s8 %v1996
    %v1998 = vlaneseq
    %v1999 = vshrl.u32 %v1998, 7
    %v2000 = vsub.s32 %v1997, %v1999
    %v2001 = vrot.slane %v1987, %v2000
    %v2002 = vcombine.low %v1994, %v2001
    %v2004 = vunpack.c.l.s4 1966171168
    %v2005 = vunpack.c.0.s8 %v2004
    %v2006 = vlaneseq
    %v2007 = vshrl.u32 %v2006, 7
    %v2008 = vsub.s32 %v2005, %v2007
    %v2009 = vrot.slane %v2002, %v2008
    %v2011 = vadd.f32 %v1775, %v2009
    %v2012 = vtanh.pop %v2011
    %v2013 = vmul.f32 %v2012, 0.5
    %v2014 = vadd.f32 %v2013, 0.5
    %v2016 = vrot.slane %v2012, 1
    %v2018 = vmul.f32 %v2016, 0.5
    %v2019 = vadd.f32 %v2018, 0.5
    %v2020 = vrot.slane %v2012, 3
    %v2022 = vmul.f32 %v2020, 0.5
    %v2023 = vadd.f32 %v2022, 0.5
    %v2024 = vmul.f32 %v2019, %v1770
    %v2025 = vrot.slane %v2012, 2
    %v2027 = vmul.f32 %v2014, %v2025
    %v2028 = vadd.f32 %v2024, %v2027
    %v2029 = vtanh.pop %v2028
    %v2030 = vmul.f32 %v2023, %v2029
    %2031 = vst [vmem:[#allocation3 + $0x6] sm:$0x1] %v2030
    %s2032 = scalar_lea.vmem [#allocation2], 7
    %v2033 = vld [vmem:[%s2032] ss:$8 sm:$0xf]
    %v2034 = vld [vmem:[#allocation4] sm:$0xff]
    %v2035 = vld [vmem:[#allocation4 + $0x8] sm:$0xff]
    %v2036 = vld [vmem:[#allocation4 + $0x10] sm:$0xff]
    %v2037 = vld [vmem:[#allocation4 + $0x18] sm:$0xff]
    %v2038 = vld [vmem:[#allocation4 + $0x20] sm:$0xff]
    %v2039 = vld [vmem:[#allocation4 + $0x28] sm:$0xff]
    %v2040 = vld [vmem:[#allocation4 + $0x30] sm:$0xff]
    %v2041 = vld [vmem:[#allocation4 + $0x38] sm:$0xff]
    %v2042 = vld [vmem:[#allocation4 + $0x40] sm:$0xff]
    %v2043 = vld [vmem:[#allocation4 + $0x48] sm:$0xff]
    %v2044 = vld [vmem:[#allocation4 + $0x50] sm:$0xff]
    %v2045 = vld [vmem:[#allocation4 + $0x58] sm:$0xff]
    %v2046 = vld [vmem:[#allocation4 + $0x60] sm:$0xff]
    %v2047 = vld [vmem:[#allocation4 + $0x68] sm:$0xff]
    %v2048 = vld [vmem:[#allocation4 + $0x70] sm:$0xff]
    %v2049 = vld [vmem:[#allocation4 + $0x78] sm:$0xff]
    %v2050 = vld [vmem:[#allocation4 + $0x80] sm:$0xff]
    %v2051 = vld [vmem:[#allocation4 + $0x88] sm:$0xff]
    %v2052 = vld [vmem:[#allocation4 + $0x90] sm:$0xff]
    %v2053 = vld [vmem:[#allocation4 + $0x98] sm:$0xff]
    %v2054 = vld [vmem:[#allocation4 + $0xa0] sm:$0xff]
    %v2055 = vld [vmem:[#allocation4 + $0xa8] sm:$0xff]
    %v2056 = vld [vmem:[#allocation4 + $0xb0] sm:$0xff]
    %v2057 = vld [vmem:[#allocation4 + $0xb8] sm:$0xff]
    %v2058 = vld [vmem:[#allocation4 + $0xc0] sm:$0xff]
    %v2059 = vld [vmem:[#allocation4 + $0xc8] sm:$0xff]
    %v2060 = vld [vmem:[#allocation4 + $0xd0] sm:$0xff]
    %v2061 = vld [vmem:[#allocation4 + $0xd8] sm:$0xff]
    %v2062 = vld [vmem:[#allocation4 + $0xe0] sm:$0xff]
    %v2063 = vld [vmem:[#allocation4 + $0xe8] sm:$0xff]
    %v2064 = vld [vmem:[#allocation4 + $0xf0] sm:$0xff]
    %v2065 = vld [vmem:[#allocation4 + $0xf8] sm:$0xff]
    %v2066 = vld [vmem:[#allocation4 + $0x100] sm:$0xff]
    %v2067 = vld [vmem:[#allocation4 + $0x108] sm:$0xff]
    %v2068 = vld [vmem:[#allocation4 + $0x110] sm:$0xff]
    %v2069 = vld [vmem:[#allocation4 + $0x118] sm:$0xff]
    %v2070 = vld [vmem:[#allocation4 + $0x120] sm:$0xff]
    %v2071 = vld [vmem:[#allocation4 + $0x128] sm:$0xff]
    %v2072 = vld [vmem:[#allocation4 + $0x130] sm:$0xff]
    %v2073 = vld [vmem:[#allocation4 + $0x138] sm:$0xff]
    %v2074 = vld [vmem:[#allocation4 + $0x140] sm:$0xff]
    %v2075 = vld [vmem:[#allocation4 + $0x148] sm:$0xff]
    %v2076 = vld [vmem:[#allocation4 + $0x150] sm:$0xff]
    %v2077 = vld [vmem:[#allocation4 + $0x158] sm:$0xff]
    %v2078 = vld [vmem:[#allocation4 + $0x160] sm:$0xff]
    %v2079 = vld [vmem:[#allocation4 + $0x168] sm:$0xff]
    %v2080 = vld [vmem:[#allocation4 + $0x170] sm:$0xff]
    %v2081 = vld [vmem:[#allocation4 + $0x178] sm:$0xff]
    %v2082 = vld [vmem:[#allocation4 + $0x180] sm:$0xff]
    %v2083 = vld [vmem:[#allocation4 + $0x188] sm:$0xff]
    %v2084 = vld [vmem:[#allocation4 + $0x190] sm:$0xff]
    %v2085 = vld [vmem:[#allocation4 + $0x198] sm:$0xff]
    %v2086 = vld [vmem:[#allocation4 + $0x1a0] sm:$0xff]
    %v2087 = vld [vmem:[#allocation4 + $0x1a8] sm:$0xff]
    %v2088 = vld [vmem:[#allocation4 + $0x1b0] sm:$0xff]
    %v2089 = vld [vmem:[#allocation4 + $0x1b8] sm:$0xff]
    %v2090 = vld [vmem:[#allocation4 + $0x1c0] sm:$0xff]
    %v2091 = vld [vmem:[#allocation4 + $0x1c8] sm:$0xff]
    %v2092 = vld [vmem:[#allocation4 + $0x1d0] sm:$0xff]
    %v2093 = vld [vmem:[#allocation4 + $0x1d8] sm:$0xff]
    %v2094 = vld [vmem:[#allocation4 + $0x1e0] sm:$0xff]
    %v2095 = vld [vmem:[#allocation4 + $0x1e8] sm:$0xff]
    %v2096 = vld [vmem:[#allocation4 + $0x1f0] sm:$0xff]
    %v2097 = vld [vmem:[#allocation4 + $0x1f8] sm:$0xff]
    %2098 = vmatprep.subr.mxu0 %v2095
    %2099 = vmatpush1.msra.mxu0 %v2094
    %2100 = vmatprep.subr.mxu0 %v2091
    %2101 = vmatpush1.msra.mxu0 %v2090
    %2102 = vmatprep.subr.mxu0 %v2087
    %2103 = vmatpush1.msra.mxu0 %v2086
    %2104 = vmatprep.subr.mxu0 %v2083
    %2105 = vmatpush1.msra.mxu0 %v2082
    %2106 = vmatprep.subr.mxu0 %v2079
    %2107 = vmatpush1.msra.mxu0 %v2078
    %2108 = vmatprep.subr.mxu0 %v2075
    %2109 = vmatpush1.msra.mxu0 %v2074
    %2110 = vmatprep.subr.mxu0 %v2071
    %2111 = vmatpush1.msra.mxu0 %v2070
    %2112 = vmatprep.subr.mxu0 %v2067
    %2113 = vmatpush1.msra.mxu0 %v2066
    %2114 = vmatprep.subr.mxu0 %v2063
    %2115 = vmatpush1.msra.mxu0 %v2062
    %2116 = vmatprep.subr.mxu0 %v2059
    %2117 = vmatpush1.msra.mxu0 %v2058
    %2118 = vmatprep.subr.mxu0 %v2055
    %2119 = vmatpush1.msra.mxu0 %v2054
    %2120 = vmatprep.subr.mxu0 %v2051
    %2121 = vmatpush1.msra.mxu0 %v2050
    %2122 = vmatprep.subr.mxu0 %v2047
    %2123 = vmatpush1.msra.mxu0 %v2046
    %2124 = vmatprep.subr.mxu0 %v2043
    %2125 = vmatpush1.msra.mxu0 %v2042
    %2126 = vmatprep.subr.mxu0 %v2039
    %2127 = vmatpush1.msra.mxu0 %v2038
    %2128 = vmatprep.subr.mxu0 %v2035
    %2129 = vmatpush1.msra.mxu0 %v2034
    %2130 = vmatprep.subr.mxu0 0.0
    %2131 = vmatpush2.msra.mxu0 0.0
    %2132 = vmatprep.subr.mxu0 0.0
    %2133 = vmatpush2.msra.mxu0 0.0
    %2134 = vmatprep.subr.mxu0 0.0
    %2135 = vmatpush2.msra.mxu0 0.0
    %2136 = vmatprep.subr.mxu0 0.0
    %2137 = vmatpush2.msra.mxu0 0.0
    %2138 = vmatprep.subr.mxu0 0.0
    %2139 = vmatpush2.msra.mxu0 0.0
    %2140 = vmatprep.subr.mxu0 0.0
    %2141 = vmatpush2.msra.mxu0 0.0
    %2142 = vmatprep.subr.mxu0 0.0
    %2143 = vmatpush2.msra.mxu0 0.0
    %2144 = vmatprep.subr.mxu0 0.0
    %2145 = vmatpush2.msra.mxu0 0.0
    %2146 = vmatprep.subr.mxu0 0.0
    %2147 = vmatpush2.msra.mxu0 0.0
    %2148 = vmatprep.subr.mxu0 0.0
    %2149 = vmatpush2.msra.mxu0 0.0
    %2150 = vmatprep.subr.mxu0 0.0
    %2151 = vmatpush2.msra.mxu0 0.0
    %2152 = vmatprep.subr.mxu0 0.0
    %2153 = vmatpush2.msra.mxu0 0.0
    %2154 = vmatprep.subr.mxu0 0.0
    %2155 = vmatpush2.msra.mxu0 0.0
    %2156 = vmatprep.subr.mxu0 0.0
    %2157 = vmatpush2.msra.mxu0 0.0
    %2158 = vmatprep.subr.mxu0 0.0
    %2159 = vmatpush2.msra.mxu0 0.0
    %2160 = vmatprep.subr.mxu0 0.0
    %2161 = vmatpush2.msra.mxu0 0.0
    %2162 = vmatprep.mubr.f32.mxu0 0.0
    %2163 = vmatmul.mubr.f32.gmra.mxu0 %v2030
    %v2164 = vpop.f32.mrf.mxu0
    %v2165 = vadd.f32 0.0, %v2164
    %v2166 = vpop.f32.mrf.mxu0
    %v2167 = vadd.f32 0.0, %v2166
    %2168 = vdwg.mxu0
    %2169 = vmatprep.subr.mxu0 %v2097
    %2170 = vmatpush1.msra.mxu0 %v2096
    %2171 = vmatprep.subr.mxu0 %v2093
    %2172 = vmatpush1.msra.mxu0 %v2092
    %2173 = vmatprep.subr.mxu0 %v2089
    %2174 = vmatpush1.msra.mxu0 %v2088
    %2175 = vmatprep.subr.mxu0 %v2085
    %2176 = vmatpush1.msra.mxu0 %v2084
    %2177 = vmatprep.subr.mxu0 %v2081
    %2178 = vmatpush1.msra.mxu0 %v2080
    %2179 = vmatprep.subr.mxu0 %v2077
    %2180 = vmatpush1.msra.mxu0 %v2076
    %2181 = vmatprep.subr.mxu0 %v2073
    %2182 = vmatpush1.msra.mxu0 %v2072
    %2183 = vmatprep.subr.mxu0 %v2069
    %2184 = vmatpush1.msra.mxu0 %v2068
    %2185 = vmatprep.subr.mxu0 %v2065
    %2186 = vmatpush1.msra.mxu0 %v2064
    %2187 = vmatprep.subr.mxu0 %v2061
    %2188 = vmatpush1.msra.mxu0 %v2060
    %2189 = vmatprep.subr.mxu0 %v2057
    %2190 = vmatpush1.msra.mxu0 %v2056
    %2191 = vmatprep.subr.mxu0 %v2053
    %2192 = vmatpush1.msra.mxu0 %v2052
    %2193 = vmatprep.subr.mxu0 %v2049
    %2194 = vmatpush1.msra.mxu0 %v2048
    %2195 = vmatprep.subr.mxu0 %v2045
    %2196 = vmatpush1.msra.mxu0 %v2044
    %2197 = vmatprep.subr.mxu0 %v2041
    %2198 = vmatpush1.msra.mxu0 %v2040
    %2199 = vmatprep.subr.mxu0 %v2037
    %2200 = vmatpush1.msra.mxu0 %v2036
    %2201 = vmatprep.subr.mxu0 0.0
    %2202 = vmatpush2.msra.mxu0 0.0
    %2203 = vmatprep.subr.mxu0 0.0
    %2204 = vmatpush2.msra.mxu0 0.0
    %2205 = vmatprep.subr.mxu0 0.0
    %2206 = vmatpush2.msra.mxu0 0.0
    %2207 = vmatprep.subr.mxu0 0.0
    %2208 = vmatpush2.msra.mxu0 0.0
    %2209 = vmatprep.subr.mxu0 0.0
    %2210 = vmatpush2.msra.mxu0 0.0
    %2211 = vmatprep.subr.mxu0 0.0
    %2212 = vmatpush2.msra.mxu0 0.0
    %2213 = vmatprep.subr.mxu0 0.0
    %2214 = vmatpush2.msra.mxu0 0.0
    %2215 = vmatprep.subr.mxu0 0.0
    %2216 = vmatpush2.msra.mxu0 0.0
    %2217 = vmatprep.subr.mxu0 0.0
    %2218 = vmatpush2.msra.mxu0 0.0
    %2219 = vmatprep.subr.mxu0 0.0
    %2220 = vmatpush2.msra.mxu0 0.0
    %2221 = vmatprep.subr.mxu0 0.0
    %2222 = vmatpush2.msra.mxu0 0.0
    %2223 = vmatprep.subr.mxu0 0.0
    %2224 = vmatpush2.msra.mxu0 0.0
    %2225 = vmatprep.subr.mxu0 0.0
    %2226 = vmatpush2.msra.mxu0 0.0
    %2227 = vmatprep.subr.mxu0 0.0
    %2228 = vmatpush2.msra.mxu0 0.0
    %2229 = vmatprep.subr.mxu0 0.0
    %2230 = vmatpush2.msra.mxu0 0.0
    %2231 = vmatprep.subr.mxu0 0.0
    %2232 = vmatpush2.msra.mxu0 0.0
    %2233 = vmatprep.mubr.f32.mxu0 0.0
    %2234 = vmatmul.mubr.f32.gmra.mxu0 %v2030
    %v2235 = vpop.f32.mrf.mxu0
    %v2236 = vadd.f32 0.0, %v2235
    %v2237 = vpop.f32.mrf.mxu0
    %v2238 = vadd.f32 0.0, %v2237
    %2239 = vdwg.mxu0
    %v2244 = vcombine.low %v2165, %v2167
    %v2245 = vcombine.low %v2236, %v2238
    %v2247 = vunpack.c.l.s4 1966171168
    %v2248 = vunpack.c.0.s8 %v2247
    %v2249 = vlaneseq
    %v2250 = vshrl.u32 %v2249, 7
    %v2251 = vsub.s32 %v2248, %v2250
    %v2252 = vrot.slane %v2244, %v2251
    %v2254 = vunpack.c.l.s4 1966171168
    %v2255 = vunpack.c.0.s8 %v2254
    %v2256 = vlaneseq
    %v2257 = vshrl.u32 %v2256, 7
    %v2258 = vsub.s32 %v2255, %v2257
    %v2259 = vrot.slane %v2245, %v2258
    %v2260 = vcombine.low %v2252, %v2259
    %v2262 = vunpack.c.l.s4 1966171168
    %v2263 = vunpack.c.0.s8 %v2262
    %v2264 = vlaneseq
    %v2265 = vshrl.u32 %v2264, 7
    %v2266 = vsub.s32 %v2263, %v2265
    %v2267 = vrot.slane %v2260, %v2266
    %v2269 = vadd.f32 %v2033, %v2267
    %v2270 = vtanh.pop %v2269
    %v2271 = vmul.f32 %v2270, 0.5
    %v2272 = vadd.f32 %v2271, 0.5
    %v2274 = vrot.slane %v2270, 1
    %v2276 = vmul.f32 %v2274, 0.5
    %v2277 = vadd.f32 %v2276, 0.5
    %v2278 = vrot.slane %v2270, 3
    %v2280 = vmul.f32 %v2278, 0.5
    %v2281 = vadd.f32 %v2280, 0.5
    %v2282 = vmul.f32 %v2277, %v2028
    %v2283 = vrot.slane %v2270, 2
    %v2285 = vmul.f32 %v2272, %v2283
    %v2286 = vadd.f32 %v2282, %v2285
    %v2287 = vtanh.pop %v2286
    %v2288 = vmul.f32 %v2281, %v2287
    %2289 = vst [vmem:[#allocation3 + $0x7] sm:$0x1] %v2288
    %v2290 = vld [vmem:[#allocation3] sm:$0xff]
    %v2291 = vld [vmem:[%s4] sm:$0xff]
    %v2292 = vld [vmem:[%s4 + $0x8] sm:$0xff]
    %v2293 = vld [vmem:[%s4 + $0x10] sm:$0xff]
    %v2294 = vld [vmem:[%s4 + $0x18] sm:$0xff]
    %v2295 = vld [vmem:[%s4 + $0x20] sm:$0xff]
    %v2296 = vld [vmem:[%s4 + $0x28] sm:$0xff]
    %v2297 = vld [vmem:[%s4 + $0x30] sm:$0xff]
    %v2298 = vld [vmem:[%s4 + $0x38] sm:$0xff]
    %v2299 = vld [vmem:[%s4 + $0x40] sm:$0xff]
    %v2300 = vld [vmem:[%s4 + $0x48] sm:$0xff]
    %v2301 = vld [vmem:[%s4 + $0x50] sm:$0xff]
    %v2302 = vld [vmem:[%s4 + $0x58] sm:$0xff]
    %v2303 = vld [vmem:[%s4 + $0x60] sm:$0xff]
    %v2304 = vld [vmem:[%s4 + $0x68] sm:$0xff]
    %v2305 = vld [vmem:[%s4 + $0x70] sm:$0xff]
    %v2306 = vld [vmem:[%s4 + $0x78] sm:$0xff]
    %v2307 = vld [vmem:[%s5] sm:$0x1]
    %v2309 = vlaneseq
    %v2310 = vshrl.u32 %v2309, 7
    %v2311 = vsub.s32 0, %v2310
    %v2312 = vrot.slane %v2307, %v2311
    %2314 = vmatprep.subr.mxu0 0.0
    %2315 = vmatpush1.msra.mxu0 %v2306
    %2316 = vmatprep.subr.mxu0 0.0
    %2317 = vmatpush1.msra.mxu0 %v2305
    %2318 = vmatprep.subr.mxu0 0.0
    %2319 = vmatpush1.msra.mxu0 %v2304
    %2320 = vmatprep.subr.mxu0 0.0
    %2321 = vmatpush1.msra.mxu0 %v2303
    %2322 = vmatprep.subr.mxu0 0.0
    %2323 = vmatpush1.msra.mxu0 %v2302
    %2324 = vmatprep.subr.mxu0 0.0
    %2325 = vmatpush1.msra.mxu0 %v2301
    %2326 = vmatprep.subr.mxu0 0.0
    %2327 = vmatpush1.msra.mxu0 %v2300
    %2328 = vmatprep.subr.mxu0 0.0
    %2329 = vmatpush1.msra.mxu0 %v2299
    %2330 = vmatprep.subr.mxu0 0.0
    %2331 = vmatpush1.msra.mxu0 %v2298
    %2332 = vmatprep.subr.mxu0 0.0
    %2333 = vmatpush1.msra.mxu0 %v2297
    %2334 = vmatprep.subr.mxu0 0.0
    %2335 = vmatpush1.msra.mxu0 %v2296
    %2336 = vmatprep.subr.mxu0 0.0
    %2337 = vmatpush1.msra.mxu0 %v2295
    %2338 = vmatprep.subr.mxu0 0.0
    %2339 = vmatpush1.msra.mxu0 %v2294
    %2340 = vmatprep.subr.mxu0 0.0
    %2341 = vmatpush1.msra.mxu0 %v2293
    %2342 = vmatprep.subr.mxu0 0.0
    %2343 = vmatpush1.msra.mxu0 %v2292
    %2344 = vmatprep.subr.mxu0 0.0
    %2345 = vmatpush1.msra.mxu0 %v2291
    %2346 = vmatprep.subr.mxu0 0.0
    %2347 = vmatpush2.msra.mxu0 0.0
    %2348 = vmatprep.subr.mxu0 0.0
    %2349 = vmatpush2.msra.mxu0 0.0
    %2350 = vmatprep.subr.mxu0 0.0
    %2351 = vmatpush2.msra.mxu0 0.0
    %2352 = vmatprep.subr.mxu0 0.0
    %2353 = vmatpush2.msra.mxu0 0.0
    %2354 = vmatprep.subr.mxu0 0.0
    %2355 = vmatpush2.msra.mxu0 0.0
    %2356 = vmatprep.subr.mxu0 0.0
    %2357 = vmatpush2.msra.mxu0 0.0
    %2358 = vmatprep.subr.mxu0 0.0
    %2359 = vmatpush2.msra.mxu0 0.0
    %2360 = vmatprep.subr.mxu0 0.0
    %2361 = vmatpush2.msra.mxu0 0.0
    %2362 = vmatprep.subr.mxu0 0.0
    %2363 = vmatpush2.msra.mxu0 0.0
    %2364 = vmatprep.subr.mxu0 0.0
    %2365 = vmatpush2.msra.mxu0 0.0
    %2366 = vmatprep.subr.mxu0 0.0
    %2367 = vmatpush2.msra.mxu0 0.0
    %2368 = vmatprep.subr.mxu0 0.0
    %2369 = vmatpush2.msra.mxu0 0.0
    %2370 = vmatprep.subr.mxu0 0.0
    %2371 = vmatpush2.msra.mxu0 0.0
    %2372 = vmatprep.subr.mxu0 0.0
    %2373 = vmatpush2.msra.mxu0 0.0
    %2374 = vmatprep.subr.mxu0 0.0
    %2375 = vmatpush2.msra.mxu0 0.0
    %2376 = vmatprep.subr.mxu0 0.0
    %2377 = vmatpush2.msra.mxu0 0.0
    %2378 = vmatprep.mubr.f32.mxu0 0.0
    %2379 = vmatmul.mubr.f32.gmra.mxu0 %v2290
    %v2380 = vpop.f32.mrf.mxu0
    %v2381 = vadd.f32 %v2312, %v2380
    %v2382 = vpop.f32.mrf.mxu0
    %2383 = vdwg.mxu0
    %vm2384 = vcmask 64512
    %v2385 = vsel %vm2384, %v2381, -inf
    %2386 = vmax.xlane.f32.xlu0 %v2385
    %v2387 = vpop.xlane.xlu0 %2386
    %v2388 = vsub.f32 %v2381, %v2387
    %v2389 = vmul.f32 %v2388, 1.442695
    %v2390 = vpow.pop %v2389
    %v2391 = vsel %vm2384, %v2390, 0.0
    %2392 = vadd.xlane.f32.xlu0 %v2391
    %v2393 = vpop.xlane.xlu0 %2392
    %v2394 = vlog2.pop %v2393
    %v2395 = vmul.f32 %v2394, 0.6931472
    %v2396 = vadd.f32 %v2395, %v2387
    %v2397 = vsub.f32 %v2381, %v2396
    %2398 = vst.msk [vmem:[#allocation7] sm:$0xff] %vm2384, %v2397
    // Predicated region
    $region30: #{tpu_custom_call.1} parent=1 // pred_check
      _
    $region31: #{tpu_custom_call.1} parent=1 // pred_check_branch
      %2400 = sbr.rel (0) target = $region33
    $region32: #{tpu_custom_call.1} parent=1 // pred_region
      %s2402 = ssub.s32 128, 128
      %2403 = vsyncadd [#allocation6], %s2402
      %s2405 = sshll.u32 [#allocation7], 4
      %s2406 = int_to_ptr.vmem [resolvable:$true] %s2405
      %2408 = dma.vmem_to_hbm [thread:$0]  %s2406, 128, %s6, [#allocation6]
    $region33: #{tpu_custom_call.1} parent=1 // pred_fallthru
      _
    // Predicated region
    $region34: #{tpu_custom_call.1} parent=1 // pred_check
      _
    $region35: #{tpu_custom_call.1} parent=1 // pred_check_branch
      %2410 = sbr.rel (0) target = $region37
    $region36: #{tpu_custom_call.1} parent=1 // pred_region
      %2411 = dma.done [#allocation6], 128
    $region37: #{tpu_custom_call.1} parent=1 // pred_fallthru
      _
    %2412 = vsyncpa [#allocation5], 1
    %2413 = vsyncpa [#allocation6], 1

</llo_original>
